<compile_context>
chip_gen: v7x
topology: tpu7x:2x2x1
jax: 0.10.0
libtpu: 0.0.40
codegen_flags: <defaults>
</compile_context>

<pallas_src>
import functools
from typing import NamedTuple

import jax
import jax.numpy as jnp
from jax.experimental import pallas as pl
from jax.experimental.pallas import tpu as pltpu


def _round_up(x, m):
    return ((x + m - 1) // m) * m


def _vmem_capacity_bytes():
    """Physical VMEM per TensorCore, generation-aware (best effort)."""
    try:
        info = pltpu.get_tpu_info()
        cap = int(getattr(info, "vmem_capacity_bytes"))
        if cap > 0:
            return cap
    except Exception:
        pass
    try:
        kind = jax.devices()[0].device_kind.lower()
    except Exception:
        kind = ""
    if "v7" in kind:
        return 64 * 1024 * 1024
    return 128 * 1024 * 1024


class TSNMeta(NamedTuple):
    K: int
    F: int
    C: int
    K_pad: int
    F_pad: int
    C_pad: int
    tile_k: int


def pack_tsn_params(params, *, tile_k_target=1024):
    """One-time parameter packing (hoisted out of the per-call path).

    Pads weights to lane-dense multiples of 128 (and K up to a multiple of the
    chosen tile_k) and casts MXU inputs to bf16.  Zero pads are exact for the
    matmul / ReLU / mean.
    """
    w_bb = jnp.asarray(params["w_bb"])
    b_bb = jnp.asarray(params["b_bb"]).reshape(1, -1)
    w_fc = jnp.asarray(params["w_fc"])
    b_fc = jnp.asarray(params["b_fc"]).reshape(1, -1)

    K, F = w_bb.shape
    C = w_fc.shape[1]

    tile_k = min(_round_up(K, 128), _round_up(tile_k_target, 128))
    K_pad = _round_up(K, tile_k)        # K padded to a multiple of tile_k
    F_pad = _round_up(F, 128)
    C_pad = _round_up(C, 128)

    packed = {
        "w_bb": jnp.pad(w_bb, ((0, K_pad - K), (0, F_pad - F))).astype(jnp.bfloat16),
        "b_bb": jnp.pad(b_bb, ((0, 0), (0, F_pad - F))).astype(jnp.float32),
        "w_fc": jnp.pad(w_fc, ((0, F_pad - F), (0, C_pad - C))).astype(jnp.bfloat16),
        "b_fc": jnp.pad(b_fc, ((0, 0), (0, C_pad - C))).astype(jnp.float32),
    }
    meta = TSNMeta(K, F, C, K_pad, F_pad, C_pad, tile_k)
    return packed, meta


def _footprint_bytes(tile_m, tile_k, T, F_pad, C_pad):
    """Estimated VMEM working set for the fused kernel."""
    acc = tile_m * F_pad * 4                      # f32 accumulator scratch
    xbuf = 2 * tile_m * tile_k * 2                # double-buffered bf16 x block
    wbuf = 2 * tile_k * F_pad * 2                 # double-buffered bf16 w_bb block
    wfc = 2 * F_pad * C_pad * 2                   # w_fc (conservatively 2x)
    obuf = 2 * max(tile_m // max(T, 1), 1) * C_pad * 4
    misc = 2 * (F_pad + C_pad) * 4 + (1 << 20)    # biases + slack
    return acc + xbuf + wbuf + wfc + obuf + misc


def _pick_tile_m(BT, T, tile_k, F_pad, C_pad, budget):
    """Input rows per M tile.

    Prefer num_m == 1 (weight streamed from HBM exactly once).  Otherwise pick
    the largest divisor of BT that is a multiple of 8*T (so per-tile output
    rows are 8-aligned) and fits the VMEM budget.
    """
    if _footprint_bytes(BT, tile_k, T, F_pad, C_pad) <= budget:
        return BT
    unit = 8 * T
    if BT % unit != 0:
        # No exact 8-aligned M split exists; keep a single M tile (this is the
        # weight-stream-optimal choice anyway) and let the caller raise the
        # VMEM limit to the actual footprint.
        return BT
    best = unit
    tm = unit
    while tm <= BT:
        if BT % tm == 0 and _footprint_bytes(tm, tile_k, T, F_pad, C_pad) <= budget:
            best = tm
        tm += unit
    return best


def _tsn_kernel(T, rows_out, x_ref, wbb_ref, bbb_ref, wfc_ref, bfc_ref,
                o_ref, acc_ref):
    k = pl.program_id(1)

    prod = jnp.dot(x_ref[...], wbb_ref[...], preferred_element_type=jnp.float32)

    @pl.when(k == 0)
    def _():
        # Write the first partial product directly (no broadcast init +
        # read-modify-write pass over the accumulator).
        acc_ref[...] = prod

    @pl.when(k != 0)
    def _():
        acc_ref[...] += prod

    @pl.when(k == pl.num_programs(1) - 1)
    def _():
        # Backbone bias folded into the finalize; ReLU in f32.
        feats = jnp.maximum(acc_ref[...] + bbb_ref[...], 0.0)
        # Dropout(p=0.8) is identity in eval mode.
        # new_fc per row, then avg consensus over T on the small logits tile
        # (exact: new_fc is affine, so mean-before/after-fc are equivalent).
        logits = jnp.dot(feats.astype(jnp.bfloat16), wfc_ref[...],
                         preferred_element_type=jnp.float32)
        c_pad = logits.shape[-1]
        out = logits.reshape(rows_out, T, c_pad).sum(axis=1) * (1.0 / T)
        o_ref[...] = (out + bfc_ref[...]).astype(o_ref.dtype)


def tsn_forward(x, packed, meta, *, num_segments):
    """TSN forward (RGB, avg consensus, before_softmax=True, eval mode).

    `packed`/`meta` come from pack_tsn_params (weights already padded + bf16).
    """
    B = x.shape[0]
    H, W = x.shape[-2], x.shape[-1]
    T = num_segments
    sample_len = 3  # RGB: 3 * new_length, new_length == 1
    BT = B * T

    K, F, C = meta.K, meta.F, meta.C
    K_pad, F_pad, C_pad = meta.K_pad, meta.F_pad, meta.C_pad
    tile_k = meta.tile_k
    assert sample_len * H * W == K, "input spatial size inconsistent with packed w_bb"

    # input.view((-1, sample_len) + input.size()[-2:]) then flatten CHW rows.
    x_flat = x.reshape(BT, K)
    x_p = jnp.pad(x_flat, ((0, 0), (0, K_pad - K))).astype(jnp.bfloat16)

    vmem_cap = _vmem_capacity_bytes()
    budget = (vmem_cap * 7) // 10
    tile_m = _pick_tile_m(BT, T, tile_k, F_pad, C_pad, budget)
    rows_out = tile_m // T
    num_m = BT // tile_m
    num_k = K_pad // tile_k

    need = _footprint_bytes(tile_m, tile_k, T, F_pad, C_pad)
    vmem_limit = int(min(max(vmem_cap - (2 << 20), 1 << 20),
                         max(budget, need + (8 << 20))))

    kern = functools.partial(_tsn_kernel, T, rows_out)

    cost = pl.CostEstimate(
        flops=2 * BT * K_pad * F_pad + 2 * BT * F_pad * C_pad,
        transcendentals=0,
        bytes_accessed=(x_p.size * 2 + num_m * packed["w_bb"].size * 2
                        + packed["w_fc"].size * 2 + B * C_pad * 4),
    )

    def _invariant_spec(shape, single_buffer):
        if single_buffer:
            return pl.BlockSpec(shape, lambda i, k: (0, 0),
                                pipeline_mode=pl.Buffered(1))
        return pl.BlockSpec(shape, lambda i, k: (0, 0))

    def run(single_buffer):
        return pl.pallas_call(
            kern,
            out_shape=jax.ShapeDtypeStruct((B, C_pad), jnp.float32),
            grid_spec=pltpu.PrefetchScalarGridSpec(
                num_scalar_prefetch=0,
                grid=(num_m, num_k),
                in_specs=[
                    pl.BlockSpec((tile_m, tile_k), lambda i, k: (i, k)),
                    pl.BlockSpec((tile_k, F_pad), lambda i, k: (k, 0)),
                    _invariant_spec((1, F_pad), single_buffer),
                    _invariant_spec((F_pad, C_pad), single_buffer),
                    _invariant_spec((1, C_pad), single_buffer),
                ],
                out_specs=pl.BlockSpec((rows_out, C_pad), lambda i, k: (i, 0)),
                scratch_shapes=[pltpu.VMEM((tile_m, F_pad), jnp.float32)],
            ),
            compiler_params=pltpu.CompilerParams(
                dimension_semantics=("parallel", "arbitrary"),
                vmem_limit_bytes=vmem_limit,
            ),
            cost_estimate=cost,
        )(x_p, packed["w_bb"], packed["b_bb"], packed["w_fc"], packed["b_fc"])

    try:
        out = run(True)
    except Exception:
        # TODO(synk): pipeline_mode=pl.Buffered(1) not accepted by this
        # jax/mosaic build; fall back to default double buffering.
        out = run(False)

    return out[:, :C]  # strip lane padding -> (B, num_class)


if __name__ == "__main__":
    B, T, H, W = 2, 4, 16, 16           # batch, num_segments, spatial
    C_IN = 3                            # RGB sample_len
    FEATURE_DIM = 32                    # stand-in for ResNet feature_dim (2048)
    NUM_CLASS = 8

    key = jax.random.PRNGKey(0)
    k1, k2, k3 = jax.random.split(key, 3)

    params = {
        # backbone stand-in (deterministic synthetic init)
        "w_bb": jax.random.normal(k1, (C_IN * H * W, FEATURE_DIM), jnp.float32) * 0.02,
        "b_bb": jnp.zeros((FEATURE_DIM,), jnp.float32),
        # new_fc: weight ~ N(0, 0.001), bias = 0  (matches TSN._prepare_tsn)
        "w_fc": jax.random.normal(k2, (FEATURE_DIM, NUM_CLASS), jnp.float32) * 0.001,
        "b_fc": jnp.zeros((NUM_CLASS,), jnp.float32),
    }

    # One-time packing (pad + bf16 cast hoisted out of the per-call path).
    packed, meta = pack_tsn_params(params)
    packed = {k: jax.block_until_ready(v) for k, v in packed.items()}

    # PyTorch-style NCHW input: (B, T*3, H, W)
    x = jax.random.normal(k3, (B, T * C_IN, H, W), jnp.float32)

    out = jax.block_until_ready(tsn_forward(x, packed, meta, num_segments=T))

    # Pure-JAX f32 reference of the same forward (fc per segment, then mean —
    # the kernel's fc-then-mean ordering is exact up to fp rounding; bf16 MXU
    # inputs require a slightly relaxed tolerance).
    x_flat = x.reshape(B * T, C_IN * H * W)
    feats_ref = jnp.maximum(x_flat @ params["w_bb"] + params["b_bb"], 0.0)
    logits_ref = feats_ref @ params["w_fc"] + params["b_fc"]
    out_ref = logits_ref.reshape(B, T, NUM_CLASS).mean(axis=1)

    assert out.shape == (B, NUM_CLASS)
    max_err = float(jnp.max(jnp.abs(out - out_ref)))
    assert jnp.allclose(out, out_ref, rtol=5e-2, atol=2e-3), max_err
    print("KERNEL_OK")
</pallas_src>

<mosaic_0001>
module attributes {stable_mosaic.version = 11 : i64} {
  func.func @_tsn_kernel(%arg0: i32, %arg1: i32, %arg2: memref<8x768xbf16, #tpu.memory_space<vmem>>, %arg3: memref<768x128xbf16, #tpu.memory_space<vmem>>, %arg4: memref<1x128xf32, #tpu.memory_space<vmem>>, %arg5: memref<128x128xbf16, #tpu.memory_space<vmem>>, %arg6: memref<1x128xf32, #tpu.memory_space<vmem>>, %arg7: memref<2x128xf32, #tpu.memory_space<vmem>>, %arg8: memref<8x128xf32, #tpu.memory_space<vmem>>) attributes {dimension_semantics = [#tpu.dimension_semantics<parallel>, #tpu.dimension_semantics<arbitrary>], iteration_bounds = array<i64: 1, 1>, scalar_prefetch = 0 : i64, scratch_operands = 1 : i64, tpu.core_type = #tpu.core_type<tc>, window_params = [{transform_indices = @transform_0, window_bounds = array<i64: 8, 768>}, {transform_indices = @transform_1, window_bounds = array<i64: 768, 128>}, {pipeline_mode = #tpu.pipeline_mode<synchronous>, transform_indices = @transform_2, window_bounds = array<i64: 1, 128>}, {pipeline_mode = #tpu.pipeline_mode<synchronous>, transform_indices = @transform_3, window_bounds = array<i64: 128, 128>}, {pipeline_mode = #tpu.pipeline_mode<synchronous>, transform_indices = @transform_4, window_bounds = array<i64: 1, 128>}, {transform_indices = @transform_5, window_bounds = array<i64: 2, 128>}]} {
    %c0 = arith.constant 0 : index
    %c0_0 = arith.constant 0 : index
    %0 = vector.load %arg2[%c0, %c0_0] : memref<8x768xbf16, #tpu.memory_space<vmem>>, vector<8x768xbf16>
    %c0_1 = arith.constant 0 : index
    %c0_2 = arith.constant 0 : index
    %1 = vector.load %arg3[%c0_1, %c0_2] : memref<768x128xbf16, #tpu.memory_space<vmem>>, vector<768x128xbf16>
    %cst = arith.constant dense<0.000000e+00> : vector<8x128xf32>
    %2 = tpu.matmul %0, %1, %cst {dimension_numbers = #tpu.dot_dimension_numbers<[1], [0], [0], [1], [0, 0, 1, 1], [], []>} : vector<8x768xbf16>, vector<768x128xbf16>, vector<8x128xf32> -> vector<8x128xf32>
    %c0_i32 = arith.constant 0 : i32
    %3 = arith.cmpi eq, %arg1, %c0_i32 : i32
    %4 = arith.extui %3 : i1 to i32
    %c0_i32_3 = arith.constant 0 : i32
    %5 = arith.cmpi ne, %4, %c0_i32_3 : i32
    scf.if %5 {
      %c0_8 = arith.constant 0 : index
      %c0_9 = arith.constant 0 : index
      %12 = vector.load %arg8[%c0_8, %c0_9] : memref<8x128xf32, #tpu.memory_space<vmem>>, vector<8x128xf32>
      tpu.vector_store %arg8[%c0_8, %c0_9], %2 {strides = array<i32>} : memref<8x128xf32, #tpu.memory_space<vmem>>, vector<8x128xf32>,
    } else {
    }
    %c0_i32_4 = arith.constant 0 : i32
    %6 = arith.cmpi ne, %arg1, %c0_i32_4 : i32
    %7 = arith.extui %6 : i1 to i32
    %c0_i32_5 = arith.constant 0 : i32
    %8 = arith.cmpi ne, %7, %c0_i32_5 : i32
    scf.if %8 {
      %c0_8 = arith.constant 0 : index
      %c0_9 = arith.constant 0 : index
      %12 = vector.load %arg8[%c0_8, %c0_9] : memref<8x128xf32, #tpu.memory_space<vmem>>, vector<8x128xf32>
      %13 = arith.addf %12, %2 : vector<8x128xf32>
      %c0_10 = arith.constant 0 : index
      %c0_11 = arith.constant 0 : index
      %14 = vector.load %arg8[%c0_10, %c0_11] : memref<8x128xf32, #tpu.memory_space<vmem>>, vector<8x128xf32>
      tpu.vector_store %arg8[%c0_10, %c0_11], %13 {strides = array<i32>} : memref<8x128xf32, #tpu.memory_space<vmem>>, vector<8x128xf32>,
    } else {
    }
    %c0_i32_6 = arith.constant 0 : i32
    %9 = arith.cmpi eq, %arg1, %c0_i32_6 : i32
    %10 = arith.extui %9 : i1 to i32
    %c0_i32_7 = arith.constant 0 : i32
    %11 = arith.cmpi ne, %10, %c0_i32_7 : i32
    scf.if %11 {
      %c0_8 = arith.constant 0 : index
      %c0_9 = arith.constant 0 : index
      %12 = vector.load %arg8[%c0_8, %c0_9] : memref<8x128xf32, #tpu.memory_space<vmem>>, vector<8x128xf32>
      %c0_10 = arith.constant 0 : index
      %c0_11 = arith.constant 0 : index
      %13 = vector.load %arg4[%c0_10, %c0_11] : memref<1x128xf32, #tpu.memory_space<vmem>>, vector<1x128xf32>
      %14 = vector.broadcast %13 : vector<1x128xf32> to vector<8x128xf32>
      %15 = arith.addf %12, %14 : vector<8x128xf32>
      %cst_12 = arith.constant 0.000000e+00 : f32
      %16 = vector.broadcast %cst_12 : f32 to vector<8x128xf32>
      %17 = arith.maximumf %15, %16 : vector<8x128xf32>
      %18 = arith.truncf %17 : vector<8x128xf32> to vector<8x128xbf16>
      %c0_13 = arith.constant 0 : index
      %c0_14 = arith.constant 0 : index
      %19 = vector.load %arg5[%c0_13, %c0_14] : memref<128x128xbf16, #tpu.memory_space<vmem>>, vector<128x128xbf16>
      %cst_15 = arith.constant dense<0.000000e+00> : vector<8x128xf32>
      %20 = tpu.matmul %18, %19, %cst_15 {dimension_numbers = #tpu.dot_dimension_numbers<[1], [0], [0], [1], [0, 0, 1, 1], [], []>} : vector<8x128xbf16>, vector<128x128xbf16>, vector<8x128xf32> -> vector<8x128xf32>
      %21 = vector.shape_cast %20 : vector<8x128xf32> to vector<2x4x128xf32>
      %cst_16 = arith.constant dense<0.000000e+00> : vector<2x128xf32>
      %22 = vector.multi_reduction <add>, %21, %cst_16 [1] : vector<2x4x128xf32> to vector<2x128xf32>
      %cst_17 = arith.constant 2.500000e-01 : f32
      %23 = vector.broadcast %cst_17 : f32 to vector<2x128xf32>
      %24 = arith.mulf %22, %23 : vector<2x128xf32>
      %c0_18 = arith.constant 0 : index
      %c0_19 = arith.constant 0 : index
      %25 = vector.load %arg6[%c0_18, %c0_19] : memref<1x128xf32, #tpu.memory_space<vmem>>, vector<1x128xf32>
      %26 = vector.broadcast %25 : vector<1x128xf32> to vector<2x128xf32>
      %27 = arith.addf %24, %26 : vector<2x128xf32>
      %c0_20 = arith.constant 0 : index
      %c0_21 = arith.constant 0 : index
      %28 = vector.load %arg7[%c0_20, %c0_21] : memref<2x128xf32, #tpu.memory_space<vmem>>, vector<2x128xf32>
      tpu.vector_store %arg7[%c0_20, %c0_21], %27 {strides = array<i32>} : memref<2x128xf32, #tpu.memory_space<vmem>>, vector<2x128xf32>,
    } else {
    }
    return
  }
  func.func @transform_0(%arg0: i32, %arg1: i32) -> (i32, i32) {
    %c0_i32 = arith.constant 0 : i32
    return %arg0, %arg1 : i32, i32
  }
  func.func @transform_1(%arg0: i32, %arg1: i32) -> (i32, i32) {
    %c0_i32 = arith.constant 0 : i32
    %c0_i32_0 = arith.constant 0 : i32
    return %arg1, %c0_i32 : i32, i32
  }
  func.func @transform_2(%arg0: i32, %arg1: i32) -> (i32, i32) {
    %c0_i32 = arith.constant 0 : i32
    %c0_i32_0 = arith.constant 0 : i32
    %c0_i32_1 = arith.constant 0 : i32
    return %c0_i32, %c0_i32_0 : i32, i32
  }
  func.func @transform_3(%arg0: i32, %arg1: i32) -> (i32, i32) {
    %c0_i32 = arith.constant 0 : i32
    %c0_i32_0 = arith.constant 0 : i32
    %c0_i32_1 = arith.constant 0 : i32
    return %c0_i32, %c0_i32_0 : i32, i32
  }
  func.func @transform_4(%arg0: i32, %arg1: i32) -> (i32, i32) {
    %c0_i32 = arith.constant 0 : i32
    %c0_i32_0 = arith.constant 0 : i32
    %c0_i32_1 = arith.constant 0 : i32
    return %c0_i32, %c0_i32_0 : i32, i32
  }
  func.func @transform_5(%arg0: i32, %arg1: i32) -> (i32, i32) {
    %c0_i32 = arith.constant 0 : i32
    %c0_i32_0 = arith.constant 0 : i32
    return %arg0, %c0_i32 : i32, i32
  }
}

module attributes {stable_mosaic.version = 11 : i64} {
  func.func @_tsn_kernel(%arg0: i32, %arg1: i32, %arg2: memref<8x768xbf16, #tpu.memory_space<vmem>>, %arg3: memref<768x128xbf16, #tpu.memory_space<vmem>>, %arg4: memref<1x128xf32, #tpu.memory_space<vmem>>, %arg5: memref<128x128xbf16, #tpu.memory_space<vmem>>, %arg6: memref<1x128xf32, #tpu.memory_space<vmem>>, %arg7: memref<2x128xf32, #tpu.memory_space<vmem>>, %arg8: memref<8x128xf32, #tpu.memory_space<vmem>>) attributes {dimension_semantics = [#tpu.dimension_semantics<parallel>, #tpu.dimension_semantics<arbitrary>], iteration_bounds = array<i64: 1, 1>, scalar_prefetch = 0 : i64, scratch_operands = 1 : i64, tpu.core_type = #tpu.core_type<tc>, window_params = [{transform_indices = @transform_0, window_bounds = array<i64: 8, 768>}, {transform_indices = @transform_1, window_bounds = array<i64: 768, 128>}, {pipeline_mode = #tpu.pipeline_mode<synchronous>, transform_indices = @transform_2, window_bounds = array<i64: 1, 128>}, {pipeline_mode = #tpu.pipeline_mode<synchronous>, transform_indices = @transform_3, window_bounds = array<i64: 128, 128>}, {pipeline_mode = #tpu.pipeline_mode<synchronous>, transform_indices = @transform_4, window_bounds = array<i64: 1, 128>}, {transform_indices = @transform_5, window_bounds = array<i64: 2, 128>}]} {
    %c0 = arith.constant 0 : index
    %c0_0 = arith.constant 0 : index
    %0 = vector.load %arg2[%c0, %c0_0] : memref<8x768xbf16, #tpu.memory_space<vmem>>, vector<8x768xbf16>
    %c0_1 = arith.constant 0 : index
    %c0_2 = arith.constant 0 : index
    %1 = vector.load %arg3[%c0_1, %c0_2] : memref<768x128xbf16, #tpu.memory_space<vmem>>, vector<768x128xbf16>
    %cst = arith.constant dense<0.000000e+00> : vector<8x128xf32>
    %2 = tpu.matmul %0, %1, %cst {dimension_numbers = #tpu.dot_dimension_numbers<[1], [0], [0], [1], [0, 0, 1, 1], [], []>} : vector<8x768xbf16>, vector<768x128xbf16>, vector<8x128xf32> -> vector<8x128xf32>
    %c0_i32 = arith.constant 0 : i32
    %3 = arith.cmpi eq, %arg1, %c0_i32 : i32
    %4 = arith.extui %3 : i1 to i32
    %c0_i32_3 = arith.constant 0 : i32
    %5 = arith.cmpi ne, %4, %c0_i32_3 : i32
    scf.if %5 {
      %c0_8 = arith.constant 0 : index
      %c0_9 = arith.constant 0 : index
      %12 = vector.load %arg8[%c0_8, %c0_9] : memref<8x128xf32, #tpu.memory_space<vmem>>, vector<8x128xf32>
      tpu.vector_store %arg8[%c0_8, %c0_9], %2 {strides = array<i32>} : memref<8x128xf32, #tpu.memory_space<vmem>>, vector<8x128xf32>,
    } else {
    }
    %c0_i32_4 = arith.constant 0 : i32
    %6 = arith.cmpi ne, %arg1, %c0_i32_4 : i32
    %7 = arith.extui %6 : i1 to i32
    %c0_i32_5 = arith.constant 0 : i32
    %8 = arith.cmpi ne, %7, %c0_i32_5 : i32
    scf.if %8 {
      %c0_8 = arith.constant 0 : index
      %c0_9 = arith.constant 0 : index
      %12 = vector.load %arg8[%c0_8, %c0_9] : memref<8x128xf32, #tpu.memory_space<vmem>>, vector<8x128xf32>
      %13 = arith.addf %12, %2 : vector<8x128xf32>
      %c0_10 = arith.constant 0 : index
      %c0_11 = arith.constant 0 : index
      %14 = vector.load %arg8[%c0_10, %c0_11] : memref<8x128xf32, #tpu.memory_space<vmem>>, vector<8x128xf32>
      tpu.vector_store %arg8[%c0_10, %c0_11], %13 {strides = array<i32>} : memref<8x128xf32, #tpu.memory_space<vmem>>, vector<8x128xf32>,
    } else {
    }
    %c0_i32_6 = arith.constant 0 : i32
    %9 = arith.cmpi eq, %arg1, %c0_i32_6 : i32
    %10 = arith.extui %9 : i1 to i32
    %c0_i32_7 = arith.constant 0 : i32
    %11 = arith.cmpi ne, %10, %c0_i32_7 : i32
    scf.if %11 {
      %c0_8 = arith.constant 0 : index
      %c0_9 = arith.constant 0 : index
      %12 = vector.load %arg8[%c0_8, %c0_9] : memref<8x128xf32, #tpu.memory_space<vmem>>, vector<8x128xf32>
      %c0_10 = arith.constant 0 : index
      %c0_11 = arith.constant 0 : index
      %13 = vector.load %arg4[%c0_10, %c0_11] : memref<1x128xf32, #tpu.memory_space<vmem>>, vector<1x128xf32>
      %14 = vector.broadcast %13 : vector<1x128xf32> to vector<8x128xf32>
      %15 = arith.addf %12, %14 : vector<8x128xf32>
      %cst_12 = arith.constant 0.000000e+00 : f32
      %16 = vector.broadcast %cst_12 : f32 to vector<8x128xf32>
      %17 = arith.maximumf %15, %16 : vector<8x128xf32>
      %18 = arith.truncf %17 : vector<8x128xf32> to vector<8x128xbf16>
      %c0_13 = arith.constant 0 : index
      %c0_14 = arith.constant 0 : index
      %19 = vector.load %arg5[%c0_13, %c0_14] : memref<128x128xbf16, #tpu.memory_space<vmem>>, vector<128x128xbf16>
      %cst_15 = arith.constant dense<0.000000e+00> : vector<8x128xf32>
      %20 = tpu.matmul %18, %19, %cst_15 {dimension_numbers = #tpu.dot_dimension_numbers<[1], [0], [0], [1], [0, 0, 1, 1], [], []>} : vector<8x128xbf16>, vector<128x128xbf16>, vector<8x128xf32> -> vector<8x128xf32>
      %21 = vector.shape_cast %20 : vector<8x128xf32> to vector<2x4x128xf32>
      %cst_16 = arith.constant dense<0.000000e+00> : vector<2x128xf32>
      %22 = vector.multi_reduction <add>, %21, %cst_16 [1] : vector<2x4x128xf32> to vector<2x128xf32>
      %cst_17 = arith.constant 2.500000e-01 : f32
      %23 = vector.broadcast %cst_17 : f32 to vector<2x128xf32>
      %24 = arith.mulf %22, %23 : vector<2x128xf32>
      %c0_18 = arith.constant 0 : index
      %c0_19 = arith.constant 0 : index
      %25 = vector.load %arg6[%c0_18, %c0_19] : memref<1x128xf32, #tpu.memory_space<vmem>>, vector<1x128xf32>
      %26 = vector.broadcast %25 : vector<1x128xf32> to vector<2x128xf32>
      %27 = arith.addf %24, %26 : vector<2x128xf32>
      %c0_20 = arith.constant 0 : index
      %c0_21 = arith.constant 0 : index
      %28 = vector.load %arg7[%c0_20, %c0_21] : memref<2x128xf32, #tpu.memory_space<vmem>>, vector<2x128xf32>
      tpu.vector_store %arg7[%c0_20, %c0_21], %27 {strides = array<i32>} : memref<2x128xf32, #tpu.memory_space<vmem>>, vector<2x128xf32>,
    } else {
    }
    return
  }
  func.func @transform_0(%arg0: i32, %arg1: i32) -> (i32, i32) {
    %c0_i32 = arith.constant 0 : i32
    return %arg0, %arg1 : i32, i32
  }
  func.func @transform_1(%arg0: i32, %arg1: i32) -> (i32, i32) {
    %c0_i32 = arith.constant 0 : i32
    %c0_i32_0 = arith.constant 0 : i32
    return %arg1, %c0_i32 : i32, i32
  }
  func.func @transform_2(%arg0: i32, %arg1: i32) -> (i32, i32) {
    %c0_i32 = arith.constant 0 : i32
    %c0_i32_0 = arith.constant 0 : i32
    %c0_i32_1 = arith.constant 0 : i32
    return %c0_i32, %c0_i32_0 : i32, i32
  }
  func.func @transform_3(%arg0: i32, %arg1: i32) -> (i32, i32) {
    %c0_i32 = arith.constant 0 : i32
    %c0_i32_0 = arith.constant 0 : i32
    %c0_i32_1 = arith.constant 0 : i32
    return %c0_i32, %c0_i32_0 : i32, i32
  }
  func.func @transform_4(%arg0: i32, %arg1: i32) -> (i32, i32) {
    %c0_i32 = arith.constant 0 : i32
    %c0_i32_0 = arith.constant 0 : i32
    %c0_i32_1 = arith.constant 0 : i32
    return %c0_i32, %c0_i32_0 : i32, i32
  }
  func.func @transform_5(%arg0: i32, %arg1: i32) -> (i32, i32) {
    %c0_i32 = arith.constant 0 : i32
    %c0_i32_0 = arith.constant 0 : i32
    return %arg0, %c0_i32 : i32, i32
  }
}

</mosaic_0001>

<llo_original>
// kernel: tpu_custom_call.1
$region0: #{tpu_custom_call.1}
  #allocation0 [shape = 'u32[]', space=smem, size = 0x4, offset = 0x4, fixed_abs, tag = 'smem constant byte address 0x4 - core index']
  #allocation1 [shape = 'u32[144,128]{1,0:T(1,128)}', space=vmem, size = 0x12000, scoped, tag = 'internal scratch']
  #allocation2 [shape = 'f32[8,128]{1,0:T(8,128)}', space=vmem, size = 0x1000, scoped, tag = 'scratch operand']
  %s0 = inlined_call_operand.hbm [shape: bf16[8,768], index: 0, kind: input, shape index: {}]
  %s1 = inlined_call_operand.hbm [shape: bf16[768,128], index: 1, kind: input, shape index: {}]
  %s2 = inlined_call_operand.hbm [shape: f32[1,128], index: 2, kind: input, shape index: {}]
  %s3 = inlined_call_operand.hbm [shape: bf16[128,128], index: 3, kind: input, shape index: {}]
  %s4 = inlined_call_operand.hbm [shape: f32[1,128], index: 4, kind: input, shape index: {}]
  %s5 = inlined_call_operand.hbm [shape: f32[2,128], index: 5, kind: output, shape index: {}]
  %s6 = sld [smem:[#allocation0]]
  $region62: #{tpu_custom_call.1} parent=0
    _
  %s8 = ssub.s32 1, %s6
  %s9 = scalar_select 0, %s8, %s6
  $region1: #{tpu_custom_call.1} parent=0
    #allocation3 [shape = 'u8[12288]{0}', space=vmem, size = 0x3000, scoped, tag = 'input window, operand 0, single buffered']
    #allocation4 [shape = 's32[1]{0}', space=sflag, size = 0x4, scoped, tag = 'scoped memory for tpu_custom_call.1']
    #allocation5 [shape = 's32[1]{0}', space=sflag, size = 0x4, scoped, tag = 'scoped memory for tpu_custom_call.1']
    #allocation6 [shape = 'u8[196608]{0}', space=vmem, size = 0x30000, scoped, tag = 'input window, operand 1, single buffered']
    #allocation7 [shape = 's32[1]{0}', space=sflag, size = 0x4, scoped, tag = 'scoped memory for tpu_custom_call.1']
    #allocation8 [shape = 'u8[512]{0}', space=vmem, size = 0x400, scoped, tag = 'input window, operand 2, single buffered']
    #allocation9 [shape = 'u8[32768]{0}', space=vmem, size = 0x8000, scoped, tag = 'input window, operand 3, single buffered']
    #allocation10 [shape = 's32[1]{0}', space=sflag, size = 0x4, scoped, tag = 'scoped memory for tpu_custom_call.1']
    #allocation11 [shape = 'u8[512]{0}', space=vmem, size = 0x400, scoped, tag = 'input window, operand 4, single buffered']
    #allocation12 [shape = 'u8[1024]{0}', space=vmem, size = 0x400, scoped, tag = 'output window, operand 0, single buffered']
    %10 = vsyncpa [#allocation4], 0
    %11 = vsyncpa [#allocation7], 0
    %12 = vsyncpa [#allocation10], 0
    %13 = vsyncpa [#allocation5], 0
    // Predicated region
    $region2: #{tpu_custom_call.1} parent=1 // pred_check
      _
    $region3: #{tpu_custom_call.1} parent=1 // pred_check_branch
      %15 = sbr.rel (0) target = $region5
    $region4: #{tpu_custom_call.1} parent=1 // pred_region
      %s17 = ssub.s32 384, 384
      %18 = vsyncadd [#allocation4], %s17
      %s20 = sshll.u32 [#allocation3], 4
      %s21 = int_to_ptr.vmem [resolvable:$true] %s20
      %23 = dma.hbm_to_vmem [thread:$0]  %s0, 384, %s21, [#allocation4]
    $region5: #{tpu_custom_call.1} parent=1 // pred_fallthru
      _
    // Predicated region
    $region6: #{tpu_custom_call.1} parent=1 // pred_check
      _
    $region7: #{tpu_custom_call.1} parent=1 // pred_check_branch
      %25 = sbr.rel (0) target = $region9
    $region8: #{tpu_custom_call.1} parent=1 // pred_region
      %s27 = ssub.s32 6144, 6144
      %28 = vsyncadd [#allocation7], %s27
      %s29 = sshll.u32 [#allocation6], 4
      %s30 = int_to_ptr.vmem [resolvable:$true] %s29
      %35 = dma.hbm_to_vmem [thread:$0]  %s1, 6144, %s30, [#allocation7], 64, 64, 4
    $region9: #{tpu_custom_call.1} parent=1 // pred_fallthru
      _
    // Predicated region
    $region10: #{tpu_custom_call.1} parent=1 // pred_check
      _
    $region11: #{tpu_custom_call.1} parent=1 // pred_check_branch
      %37 = sbr.rel (0) target = $region13
    $region12: #{tpu_custom_call.1} parent=1 // pred_region
      %s39 = ssub.s32 16, 16
      %40 = vsyncadd [#allocation7], %s39
      %s42 = sshll.u32 [#allocation8], 4
      %s43 = int_to_ptr.vmem [resolvable:$true] %s42
      %45 = dma.hbm_to_vmem [thread:$0]  %s2, 16, %s43, [#allocation7]
    $region13: #{tpu_custom_call.1} parent=1 // pred_fallthru
      _
    // Predicated region
    $region14: #{tpu_custom_call.1} parent=1 // pred_check
      _
    $region15: #{tpu_custom_call.1} parent=1 // pred_check_branch
      %47 = sbr.rel (0) target = $region17
    $region16: #{tpu_custom_call.1} parent=1 // pred_region
      %s49 = ssub.s32 1024, 1024
      %50 = vsyncadd [#allocation10], %s49
      %s51 = sshll.u32 [#allocation9], 4
      %s52 = int_to_ptr.vmem [resolvable:$true] %s51
      %57 = dma.hbm_to_vmem [thread:$0]  %s3, 1024, %s52, [#allocation10], 64, 64, 4
    $region17: #{tpu_custom_call.1} parent=1 // pred_fallthru
      _
    // Predicated region
    $region18: #{tpu_custom_call.1} parent=1 // pred_check
      _
    $region19: #{tpu_custom_call.1} parent=1 // pred_check_branch
      %59 = sbr.rel (0) target = $region21
    $region20: #{tpu_custom_call.1} parent=1 // pred_region
      %s61 = ssub.s32 16, 16
      %62 = vsyncadd [#allocation10], %s61
      %s64 = sshll.u32 [#allocation11], 4
      %s65 = int_to_ptr.vmem [resolvable:$true] %s64
      %67 = dma.hbm_to_vmem [thread:$0]  %s4, 16, %s65, [#allocation10]
    $region21: #{tpu_custom_call.1} parent=1 // pred_fallthru
      _
    // Predicated region
    $region22: #{tpu_custom_call.1} parent=1 // pred_check
      _
    $region23: #{tpu_custom_call.1} parent=1 // pred_check_branch
      %69 = sbr.rel (0) target = $region25
    $region24: #{tpu_custom_call.1} parent=1 // pred_region
      %70 = dma.done [#allocation4], 384
    $region25: #{tpu_custom_call.1} parent=1 // pred_fallthru
      _
    // Predicated region
    $region26: #{tpu_custom_call.1} parent=1 // pred_check
      _
    $region27: #{tpu_custom_call.1} parent=1 // pred_check_branch
      %72 = sbr.rel (0) target = $region29
    $region28: #{tpu_custom_call.1} parent=1 // pred_region
      %73 = dma.done [#allocation7], 6144
    $region29: #{tpu_custom_call.1} parent=1 // pred_fallthru
      _
    // Predicated region
    $region30: #{tpu_custom_call.1} parent=1 // pred_check
      _
    $region31: #{tpu_custom_call.1} parent=1 // pred_check_branch
      %75 = sbr.rel (0) target = $region33
    $region32: #{tpu_custom_call.1} parent=1 // pred_region
      %76 = dma.done [#allocation7], 16
    $region33: #{tpu_custom_call.1} parent=1 // pred_fallthru
      _
    // Predicated region
    $region34: #{tpu_custom_call.1} parent=1 // pred_check
      _
    $region35: #{tpu_custom_call.1} parent=1 // pred_check_branch
      %78 = sbr.rel (0) target = $region37
    $region36: #{tpu_custom_call.1} parent=1 // pred_region
      %79 = dma.done [#allocation10], 1024
    $region37: #{tpu_custom_call.1} parent=1 // pred_fallthru
      _
    // Predicated region
    $region38: #{tpu_custom_call.1} parent=1 // pred_check
      _
    $region39: #{tpu_custom_call.1} parent=1 // pred_check_branch
      %81 = sbr.rel (0) target = $region41
    $region40: #{tpu_custom_call.1} parent=1 // pred_region
      %82 = dma.done [#allocation10], 16
    $region41: #{tpu_custom_call.1} parent=1 // pred_fallthru
      _
    %v84 = vld [vmem:[#allocation3] sm:$0xff]
    %v85 = vld [vmem:[#allocation3 + $0x8] sm:$0xff]
    %v86 = vld [vmem:[#allocation3 + $0x10] sm:$0xff]
    %v87 = vld [vmem:[#allocation6] sm:$0xf]
    %v88 = vld [vmem:[#allocation6 + $0x4] sm:$0xf]
    %v89 = vld [vmem:[#allocation6 + $0x8] sm:$0xf]
    %v90 = vld [vmem:[#allocation6 + $0xc] sm:$0xf]
    %v91 = vld [vmem:[#allocation6 + $0x10] sm:$0xf]
    %v92 = vld [vmem:[#allocation6 + $0x14] sm:$0xf]
    %v93 = vld [vmem:[#allocation6 + $0x18] sm:$0xf]
    %v94 = vld [vmem:[#allocation6 + $0x1c] sm:$0xf]
    %v95 = vld [vmem:[#allocation6 + $0x20] sm:$0xf]
    %v96 = vld [vmem:[#allocation6 + $0x24] sm:$0xf]
    %v97 = vld [vmem:[#allocation6 + $0x28] sm:$0xf]
    %v98 = vld [vmem:[#allocation6 + $0x2c] sm:$0xf]
    %v99 = vld [vmem:[#allocation6 + $0x30] sm:$0xf]
    %v100 = vld [vmem:[#allocation6 + $0x34] sm:$0xf]
    %v101 = vld [vmem:[#allocation6 + $0x38] sm:$0xf]
    %v102 = vld [vmem:[#allocation6 + $0x3c] sm:$0xf]
    %v103 = vld [vmem:[#allocation6 + $0x40] sm:$0xf]
    %v104 = vld [vmem:[#allocation6 + $0x44] sm:$0xf]
    %v105 = vld [vmem:[#allocation6 + $0x48] sm:$0xf]
    %v106 = vld [vmem:[#allocation6 + $0x4c] sm:$0xf]
    %v107 = vld [vmem:[#allocation6 + $0x50] sm:$0xf]
    %v108 = vld [vmem:[#allocation6 + $0x54] sm:$0xf]
    %v109 = vld [vmem:[#allocation6 + $0x58] sm:$0xf]
    %v110 = vld [vmem:[#allocation6 + $0x5c] sm:$0xf]
    %v111 = vld [vmem:[#allocation6 + $0x60] sm:$0xf]
    %v112 = vld [vmem:[#allocation6 + $0x64] sm:$0xf]
    %v113 = vld [vmem:[#allocation6 + $0x68] sm:$0xf]
    %v114 = vld [vmem:[#allocation6 + $0x6c] sm:$0xf]
    %v115 = vld [vmem:[#allocation6 + $0x70] sm:$0xf]
    %v116 = vld [vmem:[#allocation6 + $0x74] sm:$0xf]
    %v117 = vld [vmem:[#allocation6 + $0x78] sm:$0xf]
    %v118 = vld [vmem:[#allocation6 + $0x7c] sm:$0xf]
    %v119 = vld [vmem:[#allocation6 + $0x80] sm:$0xf]
    %v120 = vld [vmem:[#allocation6 + $0x84] sm:$0xf]
    %v121 = vld [vmem:[#allocation6 + $0x88] sm:$0xf]
    %v122 = vld [vmem:[#allocation6 + $0x8c] sm:$0xf]
    %v123 = vld [vmem:[#allocation6 + $0x90] sm:$0xf]
    %v124 = vld [vmem:[#allocation6 + $0x94] sm:$0xf]
    %v125 = vld [vmem:[#allocation6 + $0x98] sm:$0xf]
    %v126 = vld [vmem:[#allocation6 + $0x9c] sm:$0xf]
    %v127 = vld [vmem:[#allocation6 + $0xa0] sm:$0xf]
    %v128 = vld [vmem:[#allocation6 + $0xa4] sm:$0xf]
    %v129 = vld [vmem:[#allocation6 + $0xa8] sm:$0xf]
    %v130 = vld [vmem:[#allocation6 + $0xac] sm:$0xf]
    %v131 = vld [vmem:[#allocation6 + $0xb0] sm:$0xf]
    %v132 = vld [vmem:[#allocation6 + $0xb4] sm:$0xf]
    %v133 = vld [vmem:[#allocation6 + $0xb8] sm:$0xf]
    %v134 = vld [vmem:[#allocation6 + $0xbc] sm:$0xf]
    %v135 = vld [vmem:[#allocation6 + $0xc0] sm:$0xf]
    %v136 = vld [vmem:[#allocation6 + $0xc4] sm:$0xf]
    %v137 = vld [vmem:[#allocation6 + $0xc8] sm:$0xf]
    %v138 = vld [vmem:[#allocation6 + $0xcc] sm:$0xf]
    %v139 = vld [vmem:[#allocation6 + $0xd0] sm:$0xf]
    %v140 = vld [vmem:[#allocation6 + $0xd4] sm:$0xf]
    %v141 = vld [vmem:[#allocation6 + $0xd8] sm:$0xf]
    %v142 = vld [vmem:[#allocation6 + $0xdc] sm:$0xf]
    %v143 = vld [vmem:[#allocation6 + $0xe0] sm:$0xf]
    %v144 = vld [vmem:[#allocation6 + $0xe4] sm:$0xf]
    %v145 = vld [vmem:[#allocation6 + $0xe8] sm:$0xf]
    %v146 = vld [vmem:[#allocation6 + $0xec] sm:$0xf]
    %v147 = vld [vmem:[#allocation6 + $0xf0] sm:$0xf]
    %v148 = vld [vmem:[#allocation6 + $0xf4] sm:$0xf]
    %v149 = vld [vmem:[#allocation6 + $0xf8] sm:$0xf]
    %v150 = vld [vmem:[#allocation6 + $0xfc] sm:$0xf]
    %v151 = vld [vmem:[#allocation6 + $0x100] sm:$0xf]
    %v152 = vld [vmem:[#allocation6 + $0x104] sm:$0xf]
    %v153 = vld [vmem:[#allocation6 + $0x108] sm:$0xf]
    %v154 = vld [vmem:[#allocation6 + $0x10c] sm:$0xf]
    %v155 = vld [vmem:[#allocation6 + $0x110] sm:$0xf]
    %v156 = vld [vmem:[#allocation6 + $0x114] sm:$0xf]
    %v157 = vld [vmem:[#allocation6 + $0x118] sm:$0xf]
    %v158 = vld [vmem:[#allocation6 + $0x11c] sm:$0xf]
    %v159 = vld [vmem:[#allocation6 + $0x120] sm:$0xf]
    %v160 = vld [vmem:[#allocation6 + $0x124] sm:$0xf]
    %v161 = vld [vmem:[#allocation6 + $0x128] sm:$0xf]
    %v162 = vld [vmem:[#allocation6 + $0x12c] sm:$0xf]
    %v163 = vld [vmem:[#allocation6 + $0x130] sm:$0xf]
    %v164 = vld [vmem:[#allocation6 + $0x134] sm:$0xf]
    %v165 = vld [vmem:[#allocation6 + $0x138] sm:$0xf]
    %v166 = vld [vmem:[#allocation6 + $0x13c] sm:$0xf]
    %v167 = vld [vmem:[#allocation6 + $0x140] sm:$0xf]
    %v168 = vld [vmem:[#allocation6 + $0x144] sm:$0xf]
    %v169 = vld [vmem:[#allocation6 + $0x148] sm:$0xf]
    %v170 = vld [vmem:[#allocation6 + $0x14c] sm:$0xf]
    %v171 = vld [vmem:[#allocation6 + $0x150] sm:$0xf]
    %v172 = vld [vmem:[#allocation6 + $0x154] sm:$0xf]
    %v173 = vld [vmem:[#allocation6 + $0x158] sm:$0xf]
    %v174 = vld [vmem:[#allocation6 + $0x15c] sm:$0xf]
    %v175 = vld [vmem:[#allocation6 + $0x160] sm:$0xf]
    %v176 = vld [vmem:[#allocation6 + $0x164] sm:$0xf]
    %v177 = vld [vmem:[#allocation6 + $0x168] sm:$0xf]
    %v178 = vld [vmem:[#allocation6 + $0x16c] sm:$0xf]
    %v179 = vld [vmem:[#allocation6 + $0x170] sm:$0xf]
    %v180 = vld [vmem:[#allocation6 + $0x174] sm:$0xf]
    %v181 = vld [vmem:[#allocation6 + $0x178] sm:$0xf]
    %v182 = vld [vmem:[#allocation6 + $0x17c] sm:$0xf]
    %v186 = vunpack.c.l.b16 %v84
    %v187 = vunpack.c.h.b16 %v84
    %v188 = vunpack.c.l.b16 %v85
    %v189 = vunpack.c.h.b16 %v85
    %v190 = vunpack.c.l.b16 %v86
    %v191 = vunpack.c.h.b16 %v86
    %v192 = vpack.c.b16 %v186, %v186
    %v193 = vpack.c.b16 %v187, %v187
    %v194 = vpack.c.b16 %v188, %v188
    %v195 = vpack.c.b16 %v189, %v189
    %v196 = vpack.c.b16 %v190, %v190
    %v197 = vpack.c.b16 %v191, %v191
    %v300 = vunpack.c.l.b16 %v87
    %v301 = vunpack.c.l.b16 %v88
    %v302 = vunpack.c.l.b16 %v89
    %v303 = vunpack.c.l.b16 %v90
    %v304 = vunpack.c.l.b16 %v91
    %v305 = vunpack.c.l.b16 %v92
    %v306 = vunpack.c.l.b16 %v93
    %v307 = vunpack.c.l.b16 %v94
    %v308 = vunpack.c.l.b16 %v95
    %v309 = vunpack.c.l.b16 %v96
    %v310 = vunpack.c.l.b16 %v97
    %v311 = vunpack.c.l.b16 %v98
    %v312 = vunpack.c.l.b16 %v99
    %v313 = vunpack.c.l.b16 %v100
    %v314 = vunpack.c.l.b16 %v101
    %v315 = vunpack.c.l.b16 %v102
    %v316 = vunpack.c.l.b16 %v103
    %v317 = vunpack.c.l.b16 %v104
    %v318 = vunpack.c.l.b16 %v105
    %v319 = vunpack.c.l.b16 %v106
    %v320 = vunpack.c.l.b16 %v107
    %v321 = vunpack.c.l.b16 %v108
    %v322 = vunpack.c.l.b16 %v109
    %v323 = vunpack.c.l.b16 %v110
    %v324 = vunpack.c.l.b16 %v111
    %v325 = vunpack.c.l.b16 %v112
    %v326 = vunpack.c.l.b16 %v113
    %v327 = vunpack.c.l.b16 %v114
    %v328 = vunpack.c.l.b16 %v115
    %v329 = vunpack.c.l.b16 %v116
    %v330 = vunpack.c.l.b16 %v117
    %v331 = vunpack.c.l.b16 %v118
    %v332 = vunpack.c.l.b16 %v119
    %v333 = vunpack.c.l.b16 %v120
    %v334 = vunpack.c.l.b16 %v121
    %v335 = vunpack.c.l.b16 %v122
    %v336 = vunpack.c.l.b16 %v123
    %v337 = vunpack.c.l.b16 %v124
    %v338 = vunpack.c.l.b16 %v125
    %v339 = vunpack.c.l.b16 %v126
    %v340 = vunpack.c.l.b16 %v127
    %v341 = vunpack.c.l.b16 %v128
    %v342 = vunpack.c.l.b16 %v129
    %v343 = vunpack.c.l.b16 %v130
    %v344 = vunpack.c.l.b16 %v131
    %v345 = vunpack.c.l.b16 %v132
    %v346 = vunpack.c.l.b16 %v133
    %v347 = vunpack.c.l.b16 %v134
    %v348 = vunpack.c.l.b16 %v135
    %v349 = vunpack.c.l.b16 %v136
    %v350 = vunpack.c.l.b16 %v137
    %v351 = vunpack.c.l.b16 %v138
    %v352 = vunpack.c.l.b16 %v139
    %v353 = vunpack.c.l.b16 %v140
    %v354 = vunpack.c.l.b16 %v141
    %v355 = vunpack.c.l.b16 %v142
    %v356 = vunpack.c.l.b16 %v143
    %v357 = vunpack.c.l.b16 %v144
    %v358 = vunpack.c.l.b16 %v145
    %v359 = vunpack.c.l.b16 %v146
    %v360 = vunpack.c.l.b16 %v147
    %v361 = vunpack.c.l.b16 %v148
    %v362 = vunpack.c.l.b16 %v149
    %v363 = vunpack.c.l.b16 %v150
    %v364 = vunpack.c.l.b16 %v151
    %v365 = vunpack.c.l.b16 %v152
    %v366 = vunpack.c.l.b16 %v153
    %v367 = vunpack.c.l.b16 %v154
    %v368 = vunpack.c.l.b16 %v155
    %v369 = vunpack.c.l.b16 %v156
    %v370 = vunpack.c.l.b16 %v157
    %v371 = vunpack.c.l.b16 %v158
    %v372 = vunpack.c.l.b16 %v159
    %v373 = vunpack.c.l.b16 %v160
    %v374 = vunpack.c.l.b16 %v161
    %v375 = vunpack.c.l.b16 %v162
    %v376 = vunpack.c.l.b16 %v163
    %v377 = vunpack.c.l.b16 %v164
    %v378 = vunpack.c.l.b16 %v165
    %v379 = vunpack.c.l.b16 %v166
    %v380 = vunpack.c.l.b16 %v167
    %v381 = vunpack.c.l.b16 %v168
    %v382 = vunpack.c.l.b16 %v169
    %v383 = vunpack.c.l.b16 %v170
    %v384 = vunpack.c.l.b16 %v171
    %v385 = vunpack.c.l.b16 %v172
    %v386 = vunpack.c.l.b16 %v173
    %v387 = vunpack.c.l.b16 %v174
    %v388 = vunpack.c.l.b16 %v175
    %v389 = vunpack.c.l.b16 %v176
    %v390 = vunpack.c.l.b16 %v177
    %v391 = vunpack.c.l.b16 %v178
    %v392 = vunpack.c.l.b16 %v179
    %v393 = vunpack.c.l.b16 %v180
    %v394 = vunpack.c.l.b16 %v181
    %v395 = vunpack.c.l.b16 %v182
    %v396 = vpack.c.b16 %v301, %v300
    %v397 = vpack.c.b16 %v303, %v302
    %v398 = vpack.c.b16 %v305, %v304
    %v399 = vpack.c.b16 %v307, %v306
    %v400 = vpack.c.b16 %v309, %v308
    %v401 = vpack.c.b16 %v311, %v310
    %v402 = vpack.c.b16 %v313, %v312
    %v403 = vpack.c.b16 %v315, %v314
    %v404 = vpack.c.b16 %v317, %v316
    %v405 = vpack.c.b16 %v319, %v318
    %v406 = vpack.c.b16 %v321, %v320
    %v407 = vpack.c.b16 %v323, %v322
    %v408 = vpack.c.b16 %v325, %v324
    %v409 = vpack.c.b16 %v327, %v326
    %v410 = vpack.c.b16 %v329, %v328
    %v411 = vpack.c.b16 %v331, %v330
    %v412 = vpack.c.b16 %v333, %v332
    %v413 = vpack.c.b16 %v335, %v334
    %v414 = vpack.c.b16 %v337, %v336
    %v415 = vpack.c.b16 %v339, %v338
    %v416 = vpack.c.b16 %v341, %v340
    %v417 = vpack.c.b16 %v343, %v342
    %v418 = vpack.c.b16 %v345, %v344
    %v419 = vpack.c.b16 %v347, %v346
    %v420 = vpack.c.b16 %v349, %v348
    %v421 = vpack.c.b16 %v351, %v350
    %v422 = vpack.c.b16 %v353, %v352
    %v423 = vpack.c.b16 %v355, %v354
    %v424 = vpack.c.b16 %v357, %v356
    %v425 = vpack.c.b16 %v359, %v358
    %v426 = vpack.c.b16 %v361, %v360
    %v427 = vpack.c.b16 %v363, %v362
    %v428 = vpack.c.b16 %v365, %v364
    %v429 = vpack.c.b16 %v367, %v366
    %v430 = vpack.c.b16 %v369, %v368
    %v431 = vpack.c.b16 %v371, %v370
    %v432 = vpack.c.b16 %v373, %v372
    %v433 = vpack.c.b16 %v375, %v374
    %v434 = vpack.c.b16 %v377, %v376
    %v435 = vpack.c.b16 %v379, %v378
    %v436 = vpack.c.b16 %v381, %v380
    %v437 = vpack.c.b16 %v383, %v382
    %v438 = vpack.c.b16 %v385, %v384
    %v439 = vpack.c.b16 %v387, %v386
    %v440 = vpack.c.b16 %v389, %v388
    %v441 = vpack.c.b16 %v391, %v390
    %v442 = vpack.c.b16 %v393, %v392
    %v443 = vpack.c.b16 %v395, %v394
    %492 = vmatprep.subr.bf16.mxu0 0
    %493 = vmatpush1.bf16.msra.mxu0 %v396
    %494 = vmatprep.subr.bf16.mxu0 0
    %495 = vmatpush1.bf16.msra.mxu0 %v397
    %496 = vmatprep.subr.bf16.mxu0 0
    %497 = vmatpush1.bf16.msra.mxu0 %v398
    %498 = vmatprep.subr.bf16.mxu0 0
    %499 = vmatpush1.bf16.msra.mxu0 %v399
    %500 = vmatprep.subr.bf16.mxu0 0
    %501 = vmatpush1.bf16.msra.mxu0 %v400
    %502 = vmatprep.subr.bf16.mxu0 0
    %503 = vmatpush1.bf16.msra.mxu0 %v401
    %504 = vmatprep.subr.bf16.mxu0 0
    %505 = vmatpush1.bf16.msra.mxu0 %v402
    %506 = vmatprep.subr.bf16.mxu0 0
    %507 = vmatpush1.bf16.msra.mxu0 %v403
    %508 = vmatprep.subr.bf16.mxu0 0
    %509 = vmatpush1.bf16.msra.mxu0 %v404
    %510 = vmatprep.subr.bf16.mxu0 0
    %511 = vmatpush1.bf16.msra.mxu0 %v405
    %512 = vmatprep.subr.bf16.mxu0 0
    %513 = vmatpush1.bf16.msra.mxu0 %v406
    %514 = vmatprep.subr.bf16.mxu0 0
    %515 = vmatpush1.bf16.msra.mxu0 %v407
    %516 = vmatprep.subr.bf16.mxu0 0
    %517 = vmatpush1.bf16.msra.mxu0 %v408
    %518 = vmatprep.subr.bf16.mxu0 0
    %519 = vmatpush1.bf16.msra.mxu0 %v409
    %520 = vmatprep.subr.bf16.mxu0 0
    %521 = vmatpush1.bf16.msra.mxu0 %v410
    %522 = vmatprep.subr.bf16.mxu0 0
    %523 = vmatpush1.bf16.msra.mxu0 %v411
    %524 = vmatprep.mubr.bf16.mxu0 %v193
    %525 = vmatmul.mubr.bf16.gmra.mrb[0].mxu0 %v192
    %v526 = vpop.f32.mrb[0].mxu0
    %v527 = vadd.f32 0.0, %v526
    %v528 = vpop.f32.mrb[0].mxu0
    %v529 = vpop.f32.mrb[0].mxu0
    %v530 = vpop.f32.mrb[0].mxu0
    %531 = vdwg.mxu0
    %532 = vmatprep.subr.bf16.mxu0 0
    %533 = vmatpush1.bf16.msra.mxu0 %v412
    %534 = vmatprep.subr.bf16.mxu0 0
    %535 = vmatpush1.bf16.msra.mxu0 %v413
    %536 = vmatprep.subr.bf16.mxu0 0
    %537 = vmatpush1.bf16.msra.mxu0 %v414
    %538 = vmatprep.subr.bf16.mxu0 0
    %539 = vmatpush1.bf16.msra.mxu0 %v415
    %540 = vmatprep.subr.bf16.mxu0 0
    %541 = vmatpush1.bf16.msra.mxu0 %v416
    %542 = vmatprep.subr.bf16.mxu0 0
    %543 = vmatpush1.bf16.msra.mxu0 %v417
    %544 = vmatprep.subr.bf16.mxu0 0
    %545 = vmatpush1.bf16.msra.mxu0 %v418
    %546 = vmatprep.subr.bf16.mxu0 0
    %547 = vmatpush1.bf16.msra.mxu0 %v419
    %548 = vmatprep.subr.bf16.mxu0 0
    %549 = vmatpush1.bf16.msra.mxu0 %v420
    %550 = vmatprep.subr.bf16.mxu0 0
    %551 = vmatpush1.bf16.msra.mxu0 %v421
    %552 = vmatprep.subr.bf16.mxu0 0
    %553 = vmatpush1.bf16.msra.mxu0 %v422
    %554 = vmatprep.subr.bf16.mxu0 0
    %555 = vmatpush1.bf16.msra.mxu0 %v423
    %556 = vmatprep.subr.bf16.mxu0 0
    %557 = vmatpush1.bf16.msra.mxu0 %v424
    %558 = vmatprep.subr.bf16.mxu0 0
    %559 = vmatpush1.bf16.msra.mxu0 %v425
    %560 = vmatprep.subr.bf16.mxu0 0
    %561 = vmatpush1.bf16.msra.mxu0 %v426
    %562 = vmatprep.subr.bf16.mxu0 0
    %563 = vmatpush1.bf16.msra.mxu0 %v427
    %564 = vmatprep.mubr.bf16.mxu0 %v195
    %565 = vmatmul.mubr.bf16.gmra.mrb[0].mxu0 %v194
    %v566 = vpop.f32.mrb[0].mxu0
    %v567 = vadd.f32 %v527, %v566
    %v568 = vpop.f32.mrb[0].mxu0
    %v569 = vpop.f32.mrb[0].mxu0
    %v570 = vpop.f32.mrb[0].mxu0
    %571 = vdwg.mxu0
    %572 = vmatprep.subr.bf16.mxu0 0
    %573 = vmatpush1.bf16.msra.mxu0 %v428
    %574 = vmatprep.subr.bf16.mxu0 0
    %575 = vmatpush1.bf16.msra.mxu0 %v429
    %576 = vmatprep.subr.bf16.mxu0 0
    %577 = vmatpush1.bf16.msra.mxu0 %v430
    %578 = vmatprep.subr.bf16.mxu0 0
    %579 = vmatpush1.bf16.msra.mxu0 %v431
    %580 = vmatprep.subr.bf16.mxu0 0
    %581 = vmatpush1.bf16.msra.mxu0 %v432
    %582 = vmatprep.subr.bf16.mxu0 0
    %583 = vmatpush1.bf16.msra.mxu0 %v433
    %584 = vmatprep.subr.bf16.mxu0 0
    %585 = vmatpush1.bf16.msra.mxu0 %v434
    %586 = vmatprep.subr.bf16.mxu0 0
    %587 = vmatpush1.bf16.msra.mxu0 %v435
    %588 = vmatprep.subr.bf16.mxu0 0
    %589 = vmatpush1.bf16.msra.mxu0 %v436
    %590 = vmatprep.subr.bf16.mxu0 0
    %591 = vmatpush1.bf16.msra.mxu0 %v437
    %592 = vmatprep.subr.bf16.mxu0 0
    %593 = vmatpush1.bf16.msra.mxu0 %v438
    %594 = vmatprep.subr.bf16.mxu0 0
    %595 = vmatpush1.bf16.msra.mxu0 %v439
    %596 = vmatprep.subr.bf16.mxu0 0
    %597 = vmatpush1.bf16.msra.mxu0 %v440
    %598 = vmatprep.subr.bf16.mxu0 0
    %599 = vmatpush1.bf16.msra.mxu0 %v441
    %600 = vmatprep.subr.bf16.mxu0 0
    %601 = vmatpush1.bf16.msra.mxu0 %v442
    %602 = vmatprep.subr.bf16.mxu0 0
    %603 = vmatpush1.bf16.msra.mxu0 %v443
    %604 = vmatprep.mubr.bf16.mxu0 %v197
    %605 = vmatmul.mubr.bf16.gmra.mrb[0].mxu0 %v196
    %v606 = vpop.f32.mrb[0].mxu0
    %v607 = vadd.f32 %v567, %v606
    %v608 = vpop.f32.mrb[0].mxu0
    %v609 = vpop.f32.mrb[0].mxu0
    %v610 = vpop.f32.mrb[0].mxu0
    %611 = vdwg.mxu0
    %p612 = scmp.eq.s32.totalorder 0, 0
    // Predicated region
    $region42: #{tpu_custom_call.1} parent=1 // pred_check
      %p613 = pneg %p612
    $region43: #{tpu_custom_call.1} parent=1 // pred_check_branch
      %615 = sbr.rel (%p613) target = $region45
    $region44: #{tpu_custom_call.1} parent=1 // pred_region
      %616 = vst [vmem:[#allocation2] sm:$0xff] %v607
    $region45: #{tpu_custom_call.1} parent=1 // pred_fallthru
      _
    %p617 = scmp.ne.s32.totalorder 0, 0
    // Predicated region
    $region46: #{tpu_custom_call.1} parent=1 // pred_check
      %p618 = pneg %p617
    $region47: #{tpu_custom_call.1} parent=1 // pred_check_branch
      %620 = sbr.rel (%p618) target = $region49
    $region48: #{tpu_custom_call.1} parent=1 // pred_region
      %v621 = vld [vmem:[#allocation2] sm:$0xff]
      %v622 = vadd.f32 %v621, %v607
      %623 = vst [vmem:[#allocation2] sm:$0xff] %v622
    $region49: #{tpu_custom_call.1} parent=1 // pred_fallthru
      _
    // Predicated region
    $region50: #{tpu_custom_call.1} parent=1 // pred_check
      %p624 = pneg %p612
    $region51: #{tpu_custom_call.1} parent=1 // pred_check_branch
      %626 = sbr.rel (%p624) target = $region53
    $region52: #{tpu_custom_call.1} parent=1 // pred_region
      %v627 = vld [vmem:[#allocation2] sm:$0xff]
      %v628 = vld [vmem:[#allocation8] sm:$0x1]
      %v630 = vlaneseq
      %v631 = vshrl.u32 %v630, 7
      %v632 = vsub.s32 0, %v631
      %v633 = vrot.slane %v628, %v632
      %v635 = vadd.f32 %v627, %v633
      %v636 = vmax.f32 %v635, 0.0
      %v637 = vpack.c.bf16 %v636, %v636
      %v638 = vld [vmem:[#allocation9] sm:$0xf]
      %v639 = vld [vmem:[#allocation9 + $0x4] sm:$0xf]
      %v640 = vld [vmem:[#allocation9 + $0x8] sm:$0xf]
      %v641 = vld [vmem:[#allocation9 + $0xc] sm:$0xf]
      %v642 = vld [vmem:[#allocation9 + $0x10] sm:$0xf]
      %v643 = vld [vmem:[#allocation9 + $0x14] sm:$0xf]
      %v644 = vld [vmem:[#allocation9 + $0x18] sm:$0xf]
      %v645 = vld [vmem:[#allocation9 + $0x1c] sm:$0xf]
      %v646 = vld [vmem:[#allocation9 + $0x20] sm:$0xf]
      %v647 = vld [vmem:[#allocation9 + $0x24] sm:$0xf]
      %v648 = vld [vmem:[#allocation9 + $0x28] sm:$0xf]
      %v649 = vld [vmem:[#allocation9 + $0x2c] sm:$0xf]
      %v650 = vld [vmem:[#allocation9 + $0x30] sm:$0xf]
      %v651 = vld [vmem:[#allocation9 + $0x34] sm:$0xf]
      %v652 = vld [vmem:[#allocation9 + $0x38] sm:$0xf]
      %v653 = vld [vmem:[#allocation9 + $0x3c] sm:$0xf]
      %v670 = vunpack.c.l.b16 %v638
      %v671 = vunpack.c.l.b16 %v639
      %v672 = vunpack.c.l.b16 %v640
      %v673 = vunpack.c.l.b16 %v641
      %v674 = vunpack.c.l.b16 %v642
      %v675 = vunpack.c.l.b16 %v643
      %v676 = vunpack.c.l.b16 %v644
      %v677 = vunpack.c.l.b16 %v645
      %v678 = vunpack.c.l.b16 %v646
      %v679 = vunpack.c.l.b16 %v647
      %v680 = vunpack.c.l.b16 %v648
      %v681 = vunpack.c.l.b16 %v649
      %v682 = vunpack.c.l.b16 %v650
      %v683 = vunpack.c.l.b16 %v651
      %v684 = vunpack.c.l.b16 %v652
      %v685 = vunpack.c.l.b16 %v653
      %v686 = vpack.c.b16 %v671, %v670
      %v687 = vpack.c.b16 %v673, %v672
      %v688 = vpack.c.b16 %v675, %v674
      %v689 = vpack.c.b16 %v677, %v676
      %v690 = vpack.c.b16 %v679, %v678
      %v691 = vpack.c.b16 %v681, %v680
      %v692 = vpack.c.b16 %v683, %v682
      %v693 = vpack.c.b16 %v685, %v684
      %702 = vmatprep.subr.bf16.mxu0 0
      %703 = vmatpush1.bf16.msra.mxu0 %v686
      %704 = vmatprep.subr.bf16.mxu0 0
      %705 = vmatpush1.bf16.msra.mxu0 %v687
      %706 = vmatprep.subr.bf16.mxu0 0
      %707 = vmatpush1.bf16.msra.mxu0 %v688
      %708 = vmatprep.subr.bf16.mxu0 0
      %709 = vmatpush1.bf16.msra.mxu0 %v689
      %710 = vmatprep.subr.bf16.mxu0 0
      %711 = vmatpush1.bf16.msra.mxu0 %v690
      %712 = vmatprep.subr.bf16.mxu0 0
      %713 = vmatpush1.bf16.msra.mxu0 %v691
      %714 = vmatprep.subr.bf16.mxu0 0
      %715 = vmatpush1.bf16.msra.mxu0 %v692
      %716 = vmatprep.subr.bf16.mxu0 0
      %717 = vmatpush1.bf16.msra.mxu0 %v693
      %718 = vmatprep.subr.bf16.mxu0 0
      %719 = vmatpush1.bf16.msra.mxu0 0
      %720 = vmatprep.subr.bf16.mxu0 0
      %721 = vmatpush1.bf16.msra.mxu0 0
      %722 = vmatprep.subr.bf16.mxu0 0
      %723 = vmatpush1.bf16.msra.mxu0 0
      %724 = vmatprep.subr.bf16.mxu0 0
      %725 = vmatpush1.bf16.msra.mxu0 0
      %726 = vmatprep.subr.bf16.mxu0 0
      %727 = vmatpush1.bf16.msra.mxu0 0
      %728 = vmatprep.subr.bf16.mxu0 0
      %729 = vmatpush1.bf16.msra.mxu0 0
      %730 = vmatprep.subr.bf16.mxu0 0
      %731 = vmatpush1.bf16.msra.mxu0 0
      %732 = vmatprep.subr.bf16.mxu0 0
      %733 = vmatpush1.bf16.msra.mxu0 0
      %734 = vmatprep.mubr.bf16.mxu0 0
      %735 = vmatmul.mubr.bf16.gmra.mrb[0].mxu0 %v637
      %v736 = vpop.f32.mrb[0].mxu0
      %v737 = vadd.f32 0.0, %v736
      %v738 = vpop.f32.mrb[0].mxu0
      %v739 = vpop.f32.mrb[0].mxu0
      %v740 = vpop.f32.mrb[0].mxu0
      %741 = vdwg.mxu0
      %v743 = vcombine.high %v737, %v737
      %vm745 = vcmask 1043456
      %v746 = vsel %vm745, %v737, 0.0
      %v747 = vrot.slane %v746, 4
      %v748 = vadd.f32 %v746, %v747
      %v749 = vrot.slane %v748, 2
      %v750 = vadd.f32 %v748, %v749
      %v751 = vrot.slane %v750, 1
      %v752 = vadd.f32 %v750, %v751
      %v753 = vsel %vm745, %v743, 0.0
      %v754 = vrot.slane %v753, 4
      %v755 = vadd.f32 %v753, %v754
      %v756 = vrot.slane %v755, 2
      %v757 = vadd.f32 %v755, %v756
      %v758 = vrot.slane %v757, 1
      %v759 = vadd.f32 %v757, %v758
      %v760 = vmul.f32 %v752, 0.25
      %v761 = vmul.f32 %v759, 0.25
      %v762 = vld [vmem:[#allocation11] sm:$0x1]
      %v764 = vlaneseq
      %v765 = vshrl.u32 %v764, 7
      %v766 = vsub.s32 0, %v765
      %v767 = vrot.slane %v762, %v766
      %v769 = vadd.f32 %v760, %v767
      %v770 = vadd.f32 %v761, %v767
      %v773 = vrot.slane %v770, 7
      %vm774 = vcmask 1041409
      %v775 = vsel %vm774, %v773, %v769
      %777 = vst [vmem:[#allocation12] sm:$0x3] %v775
    $region53: #{tpu_custom_call.1} parent=1 // pred_fallthru
      _
    // Predicated region
    $region54: #{tpu_custom_call.1} parent=1 // pred_check
      _
    $region55: #{tpu_custom_call.1} parent=1 // pred_check_branch
      %779 = sbr.rel (0) target = $region57
    $region56: #{tpu_custom_call.1} parent=1 // pred_region
      %s781 = ssub.s32 32, 32
      %782 = vsyncadd [#allocation5], %s781
      %s784 = sshll.u32 [#allocation12], 4
      %s785 = int_to_ptr.vmem [resolvable:$true] %s784
      %787 = dma.vmem_to_hbm [thread:$0]  %s785, 32, %s5, [#allocation5]
    $region57: #{tpu_custom_call.1} parent=1 // pred_fallthru
      _
    // Predicated region
    $region58: #{tpu_custom_call.1} parent=1 // pred_check
      _
    $region59: #{tpu_custom_call.1} parent=1 // pred_check_branch
      %789 = sbr.rel (0) target = $region61
    $region60: #{tpu_custom_call.1} parent=1 // pred_region
      %790 = dma.done [#allocation5], 32
    $region61: #{tpu_custom_call.1} parent=1 // pred_fallthru
      _
    %791 = vsyncpa [#allocation4], 1
    %792 = vsyncpa [#allocation7], 1
    %793 = vsyncpa [#allocation10], 1
    %794 = vsyncpa [#allocation5], 1

// kernel: tpu_custom_call.1
$region0: #{tpu_custom_call.1}
  #allocation0 [shape = 'u32[]', space=smem, size = 0x4, offset = 0x4, fixed_abs, tag = 'smem constant byte address 0x4 - core index']
  #allocation1 [shape = 'u32[144,128]{1,0:T(1,128)}', space=vmem, size = 0x12000, scoped, tag = 'internal scratch']
  #allocation2 [shape = 'f32[8,128]{1,0:T(8,128)}', space=vmem, size = 0x1000, scoped, tag = 'scratch operand']
  %s0 = inlined_call_operand.hbm [shape: bf16[8,768], index: 0, kind: input, shape index: {}]
  %s1 = inlined_call_operand.hbm [shape: bf16[768,128], index: 1, kind: input, shape index: {}]
  %s2 = inlined_call_operand.hbm [shape: f32[1,128], index: 2, kind: input, shape index: {}]
  %s3 = inlined_call_operand.hbm [shape: bf16[128,128], index: 3, kind: input, shape index: {}]
  %s4 = inlined_call_operand.hbm [shape: f32[1,128], index: 4, kind: input, shape index: {}]
  %s5 = inlined_call_operand.hbm [shape: f32[2,128], index: 5, kind: output, shape index: {}]
  %s6 = sld [smem:[#allocation0]]
  $region62: #{tpu_custom_call.1} parent=0
    _
  %s8 = ssub.s32 1, %s6
  %s9 = scalar_select 0, %s8, %s6
  $region1: #{tpu_custom_call.1} parent=0
    #allocation3 [shape = 'u8[12288]{0}', space=vmem, size = 0x3000, scoped, tag = 'input window, operand 0, single buffered']
    #allocation4 [shape = 's32[1]{0}', space=sflag, size = 0x4, scoped, tag = 'scoped memory for tpu_custom_call.1']
    #allocation5 [shape = 's32[1]{0}', space=sflag, size = 0x4, scoped, tag = 'scoped memory for tpu_custom_call.1']
    #allocation6 [shape = 'u8[196608]{0}', space=vmem, size = 0x30000, scoped, tag = 'input window, operand 1, single buffered']
    #allocation7 [shape = 's32[1]{0}', space=sflag, size = 0x4, scoped, tag = 'scoped memory for tpu_custom_call.1']
    #allocation8 [shape = 'u8[512]{0}', space=vmem, size = 0x400, scoped, tag = 'input window, operand 2, single buffered']
    #allocation9 [shape = 'u8[32768]{0}', space=vmem, size = 0x8000, scoped, tag = 'input window, operand 3, single buffered']
    #allocation10 [shape = 's32[1]{0}', space=sflag, size = 0x4, scoped, tag = 'scoped memory for tpu_custom_call.1']
    #allocation11 [shape = 'u8[512]{0}', space=vmem, size = 0x400, scoped, tag = 'input window, operand 4, single buffered']
    #allocation12 [shape = 'u8[1024]{0}', space=vmem, size = 0x400, scoped, tag = 'output window, operand 0, single buffered']
    %10 = vsyncpa [#allocation4], 0
    %11 = vsyncpa [#allocation7], 0
    %12 = vsyncpa [#allocation10], 0
    %13 = vsyncpa [#allocation5], 0
    // Predicated region
    $region2: #{tpu_custom_call.1} parent=1 // pred_check
      _
    $region3: #{tpu_custom_call.1} parent=1 // pred_check_branch
      %15 = sbr.rel (0) target = $region5
    $region4: #{tpu_custom_call.1} parent=1 // pred_region
      %s17 = ssub.s32 384, 384
      %18 = vsyncadd [#allocation4], %s17
      %s20 = sshll.u32 [#allocation3], 4
      %s21 = int_to_ptr.vmem [resolvable:$true] %s20
      %23 = dma.hbm_to_vmem [thread:$0]  %s0, 384, %s21, [#allocation4]
    $region5: #{tpu_custom_call.1} parent=1 // pred_fallthru
      _
    // Predicated region
    $region6: #{tpu_custom_call.1} parent=1 // pred_check
      _
    $region7: #{tpu_custom_call.1} parent=1 // pred_check_branch
      %25 = sbr.rel (0) target = $region9
    $region8: #{tpu_custom_call.1} parent=1 // pred_region
      %s27 = ssub.s32 6144, 6144
      %28 = vsyncadd [#allocation7], %s27
      %s29 = sshll.u32 [#allocation6], 4
      %s30 = int_to_ptr.vmem [resolvable:$true] %s29
      %35 = dma.hbm_to_vmem [thread:$0]  %s1, 6144, %s30, [#allocation7], 64, 64, 4
    $region9: #{tpu_custom_call.1} parent=1 // pred_fallthru
      _
    // Predicated region
    $region10: #{tpu_custom_call.1} parent=1 // pred_check
      _
    $region11: #{tpu_custom_call.1} parent=1 // pred_check_branch
      %37 = sbr.rel (0) target = $region13
    $region12: #{tpu_custom_call.1} parent=1 // pred_region
      %s39 = ssub.s32 16, 16
      %40 = vsyncadd [#allocation7], %s39
      %s42 = sshll.u32 [#allocation8], 4
      %s43 = int_to_ptr.vmem [resolvable:$true] %s42
      %45 = dma.hbm_to_vmem [thread:$0]  %s2, 16, %s43, [#allocation7]
    $region13: #{tpu_custom_call.1} parent=1 // pred_fallthru
      _
    // Predicated region
    $region14: #{tpu_custom_call.1} parent=1 // pred_check
      _
    $region15: #{tpu_custom_call.1} parent=1 // pred_check_branch
      %47 = sbr.rel (0) target = $region17
    $region16: #{tpu_custom_call.1} parent=1 // pred_region
      %s49 = ssub.s32 1024, 1024
      %50 = vsyncadd [#allocation10], %s49
      %s51 = sshll.u32 [#allocation9], 4
      %s52 = int_to_ptr.vmem [resolvable:$true] %s51
      %57 = dma.hbm_to_vmem [thread:$0]  %s3, 1024, %s52, [#allocation10], 64, 64, 4
    $region17: #{tpu_custom_call.1} parent=1 // pred_fallthru
      _
    // Predicated region
    $region18: #{tpu_custom_call.1} parent=1 // pred_check
      _
    $region19: #{tpu_custom_call.1} parent=1 // pred_check_branch
      %59 = sbr.rel (0) target = $region21
    $region20: #{tpu_custom_call.1} parent=1 // pred_region
      %s61 = ssub.s32 16, 16
      %62 = vsyncadd [#allocation10], %s61
      %s64 = sshll.u32 [#allocation11], 4
      %s65 = int_to_ptr.vmem [resolvable:$true] %s64
      %67 = dma.hbm_to_vmem [thread:$0]  %s4, 16, %s65, [#allocation10]
    $region21: #{tpu_custom_call.1} parent=1 // pred_fallthru
      _
    // Predicated region
    $region22: #{tpu_custom_call.1} parent=1 // pred_check
      _
    $region23: #{tpu_custom_call.1} parent=1 // pred_check_branch
      %69 = sbr.rel (0) target = $region25
    $region24: #{tpu_custom_call.1} parent=1 // pred_region
      %70 = dma.done [#allocation4], 384
    $region25: #{tpu_custom_call.1} parent=1 // pred_fallthru
      _
    // Predicated region
    $region26: #{tpu_custom_call.1} parent=1 // pred_check
      _
    $region27: #{tpu_custom_call.1} parent=1 // pred_check_branch
      %72 = sbr.rel (0) target = $region29
    $region28: #{tpu_custom_call.1} parent=1 // pred_region
      %73 = dma.done [#allocation7], 6144
    $region29: #{tpu_custom_call.1} parent=1 // pred_fallthru
      _
    // Predicated region
    $region30: #{tpu_custom_call.1} parent=1 // pred_check
      _
    $region31: #{tpu_custom_call.1} parent=1 // pred_check_branch
      %75 = sbr.rel (0) target = $region33
    $region32: #{tpu_custom_call.1} parent=1 // pred_region
      %76 = dma.done [#allocation7], 16
    $region33: #{tpu_custom_call.1} parent=1 // pred_fallthru
      _
    // Predicated region
    $region34: #{tpu_custom_call.1} parent=1 // pred_check
      _
    $region35: #{tpu_custom_call.1} parent=1 // pred_check_branch
      %78 = sbr.rel (0) target = $region37
    $region36: #{tpu_custom_call.1} parent=1 // pred_region
      %79 = dma.done [#allocation10], 1024
    $region37: #{tpu_custom_call.1} parent=1 // pred_fallthru
      _
    // Predicated region
    $region38: #{tpu_custom_call.1} parent=1 // pred_check
      _
    $region39: #{tpu_custom_call.1} parent=1 // pred_check_branch
      %81 = sbr.rel (0) target = $region41
    $region40: #{tpu_custom_call.1} parent=1 // pred_region
      %82 = dma.done [#allocation10], 16
    $region41: #{tpu_custom_call.1} parent=1 // pred_fallthru
      _
    %v84 = vld [vmem:[#allocation3] sm:$0xff]
    %v85 = vld [vmem:[#allocation3 + $0x8] sm:$0xff]
    %v86 = vld [vmem:[#allocation3 + $0x10] sm:$0xff]
    %v87 = vld [vmem:[#allocation6] sm:$0xf]
    %v88 = vld [vmem:[#allocation6 + $0x4] sm:$0xf]
    %v89 = vld [vmem:[#allocation6 + $0x8] sm:$0xf]
    %v90 = vld [vmem:[#allocation6 + $0xc] sm:$0xf]
    %v91 = vld [vmem:[#allocation6 + $0x10] sm:$0xf]
    %v92 = vld [vmem:[#allocation6 + $0x14] sm:$0xf]
    %v93 = vld [vmem:[#allocation6 + $0x18] sm:$0xf]
    %v94 = vld [vmem:[#allocation6 + $0x1c] sm:$0xf]
    %v95 = vld [vmem:[#allocation6 + $0x20] sm:$0xf]
    %v96 = vld [vmem:[#allocation6 + $0x24] sm:$0xf]
    %v97 = vld [vmem:[#allocation6 + $0x28] sm:$0xf]
    %v98 = vld [vmem:[#allocation6 + $0x2c] sm:$0xf]
    %v99 = vld [vmem:[#allocation6 + $0x30] sm:$0xf]
    %v100 = vld [vmem:[#allocation6 + $0x34] sm:$0xf]
    %v101 = vld [vmem:[#allocation6 + $0x38] sm:$0xf]
    %v102 = vld [vmem:[#allocation6 + $0x3c] sm:$0xf]
    %v103 = vld [vmem:[#allocation6 + $0x40] sm:$0xf]
    %v104 = vld [vmem:[#allocation6 + $0x44] sm:$0xf]
    %v105 = vld [vmem:[#allocation6 + $0x48] sm:$0xf]
    %v106 = vld [vmem:[#allocation6 + $0x4c] sm:$0xf]
    %v107 = vld [vmem:[#allocation6 + $0x50] sm:$0xf]
    %v108 = vld [vmem:[#allocation6 + $0x54] sm:$0xf]
    %v109 = vld [vmem:[#allocation6 + $0x58] sm:$0xf]
    %v110 = vld [vmem:[#allocation6 + $0x5c] sm:$0xf]
    %v111 = vld [vmem:[#allocation6 + $0x60] sm:$0xf]
    %v112 = vld [vmem:[#allocation6 + $0x64] sm:$0xf]
    %v113 = vld [vmem:[#allocation6 + $0x68] sm:$0xf]
    %v114 = vld [vmem:[#allocation6 + $0x6c] sm:$0xf]
    %v115 = vld [vmem:[#allocation6 + $0x70] sm:$0xf]
    %v116 = vld [vmem:[#allocation6 + $0x74] sm:$0xf]
    %v117 = vld [vmem:[#allocation6 + $0x78] sm:$0xf]
    %v118 = vld [vmem:[#allocation6 + $0x7c] sm:$0xf]
    %v119 = vld [vmem:[#allocation6 + $0x80] sm:$0xf]
    %v120 = vld [vmem:[#allocation6 + $0x84] sm:$0xf]
    %v121 = vld [vmem:[#allocation6 + $0x88] sm:$0xf]
    %v122 = vld [vmem:[#allocation6 + $0x8c] sm:$0xf]
    %v123 = vld [vmem:[#allocation6 + $0x90] sm:$0xf]
    %v124 = vld [vmem:[#allocation6 + $0x94] sm:$0xf]
    %v125 = vld [vmem:[#allocation6 + $0x98] sm:$0xf]
    %v126 = vld [vmem:[#allocation6 + $0x9c] sm:$0xf]
    %v127 = vld [vmem:[#allocation6 + $0xa0] sm:$0xf]
    %v128 = vld [vmem:[#allocation6 + $0xa4] sm:$0xf]
    %v129 = vld [vmem:[#allocation6 + $0xa8] sm:$0xf]
    %v130 = vld [vmem:[#allocation6 + $0xac] sm:$0xf]
    %v131 = vld [vmem:[#allocation6 + $0xb0] sm:$0xf]
    %v132 = vld [vmem:[#allocation6 + $0xb4] sm:$0xf]
    %v133 = vld [vmem:[#allocation6 + $0xb8] sm:$0xf]
    %v134 = vld [vmem:[#allocation6 + $0xbc] sm:$0xf]
    %v135 = vld [vmem:[#allocation6 + $0xc0] sm:$0xf]
    %v136 = vld [vmem:[#allocation6 + $0xc4] sm:$0xf]
    %v137 = vld [vmem:[#allocation6 + $0xc8] sm:$0xf]
    %v138 = vld [vmem:[#allocation6 + $0xcc] sm:$0xf]
    %v139 = vld [vmem:[#allocation6 + $0xd0] sm:$0xf]
    %v140 = vld [vmem:[#allocation6 + $0xd4] sm:$0xf]
    %v141 = vld [vmem:[#allocation6 + $0xd8] sm:$0xf]
    %v142 = vld [vmem:[#allocation6 + $0xdc] sm:$0xf]
    %v143 = vld [vmem:[#allocation6 + $0xe0] sm:$0xf]
    %v144 = vld [vmem:[#allocation6 + $0xe4] sm:$0xf]
    %v145 = vld [vmem:[#allocation6 + $0xe8] sm:$0xf]
    %v146 = vld [vmem:[#allocation6 + $0xec] sm:$0xf]
    %v147 = vld [vmem:[#allocation6 + $0xf0] sm:$0xf]
    %v148 = vld [vmem:[#allocation6 + $0xf4] sm:$0xf]
    %v149 = vld [vmem:[#allocation6 + $0xf8] sm:$0xf]
    %v150 = vld [vmem:[#allocation6 + $0xfc] sm:$0xf]
    %v151 = vld [vmem:[#allocation6 + $0x100] sm:$0xf]
    %v152 = vld [vmem:[#allocation6 + $0x104] sm:$0xf]
    %v153 = vld [vmem:[#allocation6 + $0x108] sm:$0xf]
    %v154 = vld [vmem:[#allocation6 + $0x10c] sm:$0xf]
    %v155 = vld [vmem:[#allocation6 + $0x110] sm:$0xf]
    %v156 = vld [vmem:[#allocation6 + $0x114] sm:$0xf]
    %v157 = vld [vmem:[#allocation6 + $0x118] sm:$0xf]
    %v158 = vld [vmem:[#allocation6 + $0x11c] sm:$0xf]
    %v159 = vld [vmem:[#allocation6 + $0x120] sm:$0xf]
    %v160 = vld [vmem:[#allocation6 + $0x124] sm:$0xf]
    %v161 = vld [vmem:[#allocation6 + $0x128] sm:$0xf]
    %v162 = vld [vmem:[#allocation6 + $0x12c] sm:$0xf]
    %v163 = vld [vmem:[#allocation6 + $0x130] sm:$0xf]
    %v164 = vld [vmem:[#allocation6 + $0x134] sm:$0xf]
    %v165 = vld [vmem:[#allocation6 + $0x138] sm:$0xf]
    %v166 = vld [vmem:[#allocation6 + $0x13c] sm:$0xf]
    %v167 = vld [vmem:[#allocation6 + $0x140] sm:$0xf]
    %v168 = vld [vmem:[#allocation6 + $0x144] sm:$0xf]
    %v169 = vld [vmem:[#allocation6 + $0x148] sm:$0xf]
    %v170 = vld [vmem:[#allocation6 + $0x14c] sm:$0xf]
    %v171 = vld [vmem:[#allocation6 + $0x150] sm:$0xf]
    %v172 = vld [vmem:[#allocation6 + $0x154] sm:$0xf]
    %v173 = vld [vmem:[#allocation6 + $0x158] sm:$0xf]
    %v174 = vld [vmem:[#allocation6 + $0x15c] sm:$0xf]
    %v175 = vld [vmem:[#allocation6 + $0x160] sm:$0xf]
    %v176 = vld [vmem:[#allocation6 + $0x164] sm:$0xf]
    %v177 = vld [vmem:[#allocation6 + $0x168] sm:$0xf]
    %v178 = vld [vmem:[#allocation6 + $0x16c] sm:$0xf]
    %v179 = vld [vmem:[#allocation6 + $0x170] sm:$0xf]
    %v180 = vld [vmem:[#allocation6 + $0x174] sm:$0xf]
    %v181 = vld [vmem:[#allocation6 + $0x178] sm:$0xf]
    %v182 = vld [vmem:[#allocation6 + $0x17c] sm:$0xf]
    %v186 = vunpack.c.l.b16 %v84
    %v187 = vunpack.c.h.b16 %v84
    %v188 = vunpack.c.l.b16 %v85
    %v189 = vunpack.c.h.b16 %v85
    %v190 = vunpack.c.l.b16 %v86
    %v191 = vunpack.c.h.b16 %v86
    %v192 = vpack.c.b16 %v186, %v186
    %v193 = vpack.c.b16 %v187, %v187
    %v194 = vpack.c.b16 %v188, %v188
    %v195 = vpack.c.b16 %v189, %v189
    %v196 = vpack.c.b16 %v190, %v190
    %v197 = vpack.c.b16 %v191, %v191
    %v300 = vunpack.c.l.b16 %v87
    %v301 = vunpack.c.l.b16 %v88
    %v302 = vunpack.c.l.b16 %v89
    %v303 = vunpack.c.l.b16 %v90
    %v304 = vunpack.c.l.b16 %v91
    %v305 = vunpack.c.l.b16 %v92
    %v306 = vunpack.c.l.b16 %v93
    %v307 = vunpack.c.l.b16 %v94
    %v308 = vunpack.c.l.b16 %v95
    %v309 = vunpack.c.l.b16 %v96
    %v310 = vunpack.c.l.b16 %v97
    %v311 = vunpack.c.l.b16 %v98
    %v312 = vunpack.c.l.b16 %v99
    %v313 = vunpack.c.l.b16 %v100
    %v314 = vunpack.c.l.b16 %v101
    %v315 = vunpack.c.l.b16 %v102
    %v316 = vunpack.c.l.b16 %v103
    %v317 = vunpack.c.l.b16 %v104
    %v318 = vunpack.c.l.b16 %v105
    %v319 = vunpack.c.l.b16 %v106
    %v320 = vunpack.c.l.b16 %v107
    %v321 = vunpack.c.l.b16 %v108
    %v322 = vunpack.c.l.b16 %v109
    %v323 = vunpack.c.l.b16 %v110
    %v324 = vunpack.c.l.b16 %v111
    %v325 = vunpack.c.l.b16 %v112
    %v326 = vunpack.c.l.b16 %v113
    %v327 = vunpack.c.l.b16 %v114
    %v328 = vunpack.c.l.b16 %v115
    %v329 = vunpack.c.l.b16 %v116
    %v330 = vunpack.c.l.b16 %v117
    %v331 = vunpack.c.l.b16 %v118
    %v332 = vunpack.c.l.b16 %v119
    %v333 = vunpack.c.l.b16 %v120
    %v334 = vunpack.c.l.b16 %v121
    %v335 = vunpack.c.l.b16 %v122
    %v336 = vunpack.c.l.b16 %v123
    %v337 = vunpack.c.l.b16 %v124
    %v338 = vunpack.c.l.b16 %v125
    %v339 = vunpack.c.l.b16 %v126
    %v340 = vunpack.c.l.b16 %v127
    %v341 = vunpack.c.l.b16 %v128
    %v342 = vunpack.c.l.b16 %v129
    %v343 = vunpack.c.l.b16 %v130
    %v344 = vunpack.c.l.b16 %v131
    %v345 = vunpack.c.l.b16 %v132
    %v346 = vunpack.c.l.b16 %v133
    %v347 = vunpack.c.l.b16 %v134
    %v348 = vunpack.c.l.b16 %v135
    %v349 = vunpack.c.l.b16 %v136
    %v350 = vunpack.c.l.b16 %v137
    %v351 = vunpack.c.l.b16 %v138
    %v352 = vunpack.c.l.b16 %v139
    %v353 = vunpack.c.l.b16 %v140
    %v354 = vunpack.c.l.b16 %v141
    %v355 = vunpack.c.l.b16 %v142
    %v356 = vunpack.c.l.b16 %v143
    %v357 = vunpack.c.l.b16 %v144
    %v358 = vunpack.c.l.b16 %v145
    %v359 = vunpack.c.l.b16 %v146
    %v360 = vunpack.c.l.b16 %v147
    %v361 = vunpack.c.l.b16 %v148
    %v362 = vunpack.c.l.b16 %v149
    %v363 = vunpack.c.l.b16 %v150
    %v364 = vunpack.c.l.b16 %v151
    %v365 = vunpack.c.l.b16 %v152
    %v366 = vunpack.c.l.b16 %v153
    %v367 = vunpack.c.l.b16 %v154
    %v368 = vunpack.c.l.b16 %v155
    %v369 = vunpack.c.l.b16 %v156
    %v370 = vunpack.c.l.b16 %v157
    %v371 = vunpack.c.l.b16 %v158
    %v372 = vunpack.c.l.b16 %v159
    %v373 = vunpack.c.l.b16 %v160
    %v374 = vunpack.c.l.b16 %v161
    %v375 = vunpack.c.l.b16 %v162
    %v376 = vunpack.c.l.b16 %v163
    %v377 = vunpack.c.l.b16 %v164
    %v378 = vunpack.c.l.b16 %v165
    %v379 = vunpack.c.l.b16 %v166
    %v380 = vunpack.c.l.b16 %v167
    %v381 = vunpack.c.l.b16 %v168
    %v382 = vunpack.c.l.b16 %v169
    %v383 = vunpack.c.l.b16 %v170
    %v384 = vunpack.c.l.b16 %v171
    %v385 = vunpack.c.l.b16 %v172
    %v386 = vunpack.c.l.b16 %v173
    %v387 = vunpack.c.l.b16 %v174
    %v388 = vunpack.c.l.b16 %v175
    %v389 = vunpack.c.l.b16 %v176
    %v390 = vunpack.c.l.b16 %v177
    %v391 = vunpack.c.l.b16 %v178
    %v392 = vunpack.c.l.b16 %v179
    %v393 = vunpack.c.l.b16 %v180
    %v394 = vunpack.c.l.b16 %v181
    %v395 = vunpack.c.l.b16 %v182
    %v396 = vpack.c.b16 %v301, %v300
    %v397 = vpack.c.b16 %v303, %v302
    %v398 = vpack.c.b16 %v305, %v304
    %v399 = vpack.c.b16 %v307, %v306
    %v400 = vpack.c.b16 %v309, %v308
    %v401 = vpack.c.b16 %v311, %v310
    %v402 = vpack.c.b16 %v313, %v312
    %v403 = vpack.c.b16 %v315, %v314
    %v404 = vpack.c.b16 %v317, %v316
    %v405 = vpack.c.b16 %v319, %v318
    %v406 = vpack.c.b16 %v321, %v320
    %v407 = vpack.c.b16 %v323, %v322
    %v408 = vpack.c.b16 %v325, %v324
    %v409 = vpack.c.b16 %v327, %v326
    %v410 = vpack.c.b16 %v329, %v328
    %v411 = vpack.c.b16 %v331, %v330
    %v412 = vpack.c.b16 %v333, %v332
    %v413 = vpack.c.b16 %v335, %v334
    %v414 = vpack.c.b16 %v337, %v336
    %v415 = vpack.c.b16 %v339, %v338
    %v416 = vpack.c.b16 %v341, %v340
    %v417 = vpack.c.b16 %v343, %v342
    %v418 = vpack.c.b16 %v345, %v344
    %v419 = vpack.c.b16 %v347, %v346
    %v420 = vpack.c.b16 %v349, %v348
    %v421 = vpack.c.b16 %v351, %v350
    %v422 = vpack.c.b16 %v353, %v352
    %v423 = vpack.c.b16 %v355, %v354
    %v424 = vpack.c.b16 %v357, %v356
    %v425 = vpack.c.b16 %v359, %v358
    %v426 = vpack.c.b16 %v361, %v360
    %v427 = vpack.c.b16 %v363, %v362
    %v428 = vpack.c.b16 %v365, %v364
    %v429 = vpack.c.b16 %v367, %v366
    %v430 = vpack.c.b16 %v369, %v368
    %v431 = vpack.c.b16 %v371, %v370
    %v432 = vpack.c.b16 %v373, %v372
    %v433 = vpack.c.b16 %v375, %v374
    %v434 = vpack.c.b16 %v377, %v376
    %v435 = vpack.c.b16 %v379, %v378
    %v436 = vpack.c.b16 %v381, %v380
    %v437 = vpack.c.b16 %v383, %v382
    %v438 = vpack.c.b16 %v385, %v384
    %v439 = vpack.c.b16 %v387, %v386
    %v440 = vpack.c.b16 %v389, %v388
    %v441 = vpack.c.b16 %v391, %v390
    %v442 = vpack.c.b16 %v393, %v392
    %v443 = vpack.c.b16 %v395, %v394
    %492 = vmatprep.subr.bf16.mxu0 0
    %493 = vmatpush1.bf16.msra.mxu0 %v396
    %494 = vmatprep.subr.bf16.mxu0 0
    %495 = vmatpush1.bf16.msra.mxu0 %v397
    %496 = vmatprep.subr.bf16.mxu0 0
    %497 = vmatpush1.bf16.msra.mxu0 %v398
    %498 = vmatprep.subr.bf16.mxu0 0
    %499 = vmatpush1.bf16.msra.mxu0 %v399
    %500 = vmatprep.subr.bf16.mxu0 0
    %501 = vmatpush1.bf16.msra.mxu0 %v400
    %502 = vmatprep.subr.bf16.mxu0 0
    %503 = vmatpush1.bf16.msra.mxu0 %v401
    %504 = vmatprep.subr.bf16.mxu0 0
    %505 = vmatpush1.bf16.msra.mxu0 %v402
    %506 = vmatprep.subr.bf16.mxu0 0
    %507 = vmatpush1.bf16.msra.mxu0 %v403
    %508 = vmatprep.subr.bf16.mxu0 0
    %509 = vmatpush1.bf16.msra.mxu0 %v404
    %510 = vmatprep.subr.bf16.mxu0 0
    %511 = vmatpush1.bf16.msra.mxu0 %v405
    %512 = vmatprep.subr.bf16.mxu0 0
    %513 = vmatpush1.bf16.msra.mxu0 %v406
    %514 = vmatprep.subr.bf16.mxu0 0
    %515 = vmatpush1.bf16.msra.mxu0 %v407
    %516 = vmatprep.subr.bf16.mxu0 0
    %517 = vmatpush1.bf16.msra.mxu0 %v408
    %518 = vmatprep.subr.bf16.mxu0 0
    %519 = vmatpush1.bf16.msra.mxu0 %v409
    %520 = vmatprep.subr.bf16.mxu0 0
    %521 = vmatpush1.bf16.msra.mxu0 %v410
    %522 = vmatprep.subr.bf16.mxu0 0
    %523 = vmatpush1.bf16.msra.mxu0 %v411
    %524 = vmatprep.mubr.bf16.mxu0 %v193
    %525 = vmatmul.mubr.bf16.gmra.mrb[0].mxu0 %v192
    %v526 = vpop.f32.mrb[0].mxu0
    %v527 = vadd.f32 0.0, %v526
    %v528 = vpop.f32.mrb[0].mxu0
    %v529 = vpop.f32.mrb[0].mxu0
    %v530 = vpop.f32.mrb[0].mxu0
    %531 = vdwg.mxu0
    %532 = vmatprep.subr.bf16.mxu0 0
    %533 = vmatpush1.bf16.msra.mxu0 %v412
    %534 = vmatprep.subr.bf16.mxu0 0
    %535 = vmatpush1.bf16.msra.mxu0 %v413
    %536 = vmatprep.subr.bf16.mxu0 0
    %537 = vmatpush1.bf16.msra.mxu0 %v414
    %538 = vmatprep.subr.bf16.mxu0 0
    %539 = vmatpush1.bf16.msra.mxu0 %v415
    %540 = vmatprep.subr.bf16.mxu0 0
    %541 = vmatpush1.bf16.msra.mxu0 %v416
    %542 = vmatprep.subr.bf16.mxu0 0
    %543 = vmatpush1.bf16.msra.mxu0 %v417
    %544 = vmatprep.subr.bf16.mxu0 0
    %545 = vmatpush1.bf16.msra.mxu0 %v418
    %546 = vmatprep.subr.bf16.mxu0 0
    %547 = vmatpush1.bf16.msra.mxu0 %v419
    %548 = vmatprep.subr.bf16.mxu0 0
    %549 = vmatpush1.bf16.msra.mxu0 %v420
    %550 = vmatprep.subr.bf16.mxu0 0
    %551 = vmatpush1.bf16.msra.mxu0 %v421
    %552 = vmatprep.subr.bf16.mxu0 0
    %553 = vmatpush1.bf16.msra.mxu0 %v422
    %554 = vmatprep.subr.bf16.mxu0 0
    %555 = vmatpush1.bf16.msra.mxu0 %v423
    %556 = vmatprep.subr.bf16.mxu0 0
    %557 = vmatpush1.bf16.msra.mxu0 %v424
    %558 = vmatprep.subr.bf16.mxu0 0
    %559 = vmatpush1.bf16.msra.mxu0 %v425
    %560 = vmatprep.subr.bf16.mxu0 0
    %561 = vmatpush1.bf16.msra.mxu0 %v426
    %562 = vmatprep.subr.bf16.mxu0 0
    %563 = vmatpush1.bf16.msra.mxu0 %v427
    %564 = vmatprep.mubr.bf16.mxu0 %v195
    %565 = vmatmul.mubr.bf16.gmra.mrb[0].mxu0 %v194
    %v566 = vpop.f32.mrb[0].mxu0
    %v567 = vadd.f32 %v527, %v566
    %v568 = vpop.f32.mrb[0].mxu0
    %v569 = vpop.f32.mrb[0].mxu0
    %v570 = vpop.f32.mrb[0].mxu0
    %571 = vdwg.mxu0
    %572 = vmatprep.subr.bf16.mxu0 0
    %573 = vmatpush1.bf16.msra.mxu0 %v428
    %574 = vmatprep.subr.bf16.mxu0 0
    %575 = vmatpush1.bf16.msra.mxu0 %v429
    %576 = vmatprep.subr.bf16.mxu0 0
    %577 = vmatpush1.bf16.msra.mxu0 %v430
    %578 = vmatprep.subr.bf16.mxu0 0
    %579 = vmatpush1.bf16.msra.mxu0 %v431
    %580 = vmatprep.subr.bf16.mxu0 0
    %581 = vmatpush1.bf16.msra.mxu0 %v432
    %582 = vmatprep.subr.bf16.mxu0 0
    %583 = vmatpush1.bf16.msra.mxu0 %v433
    %584 = vmatprep.subr.bf16.mxu0 0
    %585 = vmatpush1.bf16.msra.mxu0 %v434
    %586 = vmatprep.subr.bf16.mxu0 0
    %587 = vmatpush1.bf16.msra.mxu0 %v435
    %588 = vmatprep.subr.bf16.mxu0 0
    %589 = vmatpush1.bf16.msra.mxu0 %v436
    %590 = vmatprep.subr.bf16.mxu0 0
    %591 = vmatpush1.bf16.msra.mxu0 %v437
    %592 = vmatprep.subr.bf16.mxu0 0
    %593 = vmatpush1.bf16.msra.mxu0 %v438
    %594 = vmatprep.subr.bf16.mxu0 0
    %595 = vmatpush1.bf16.msra.mxu0 %v439
    %596 = vmatprep.subr.bf16.mxu0 0
    %597 = vmatpush1.bf16.msra.mxu0 %v440
    %598 = vmatprep.subr.bf16.mxu0 0
    %599 = vmatpush1.bf16.msra.mxu0 %v441
    %600 = vmatprep.subr.bf16.mxu0 0
    %601 = vmatpush1.bf16.msra.mxu0 %v442
    %602 = vmatprep.subr.bf16.mxu0 0
    %603 = vmatpush1.bf16.msra.mxu0 %v443
    %604 = vmatprep.mubr.bf16.mxu0 %v197
    %605 = vmatmul.mubr.bf16.gmra.mrb[0].mxu0 %v196
    %v606 = vpop.f32.mrb[0].mxu0
    %v607 = vadd.f32 %v567, %v606
    %v608 = vpop.f32.mrb[0].mxu0
    %v609 = vpop.f32.mrb[0].mxu0
    %v610 = vpop.f32.mrb[0].mxu0
    %611 = vdwg.mxu0
    %p612 = scmp.eq.s32.totalorder 0, 0
    // Predicated region
    $region42: #{tpu_custom_call.1} parent=1 // pred_check
      %p613 = pneg %p612
    $region43: #{tpu_custom_call.1} parent=1 // pred_check_branch
      %615 = sbr.rel (%p613) target = $region45
    $region44: #{tpu_custom_call.1} parent=1 // pred_region
      %616 = vst [vmem:[#allocation2] sm:$0xff] %v607
    $region45: #{tpu_custom_call.1} parent=1 // pred_fallthru
      _
    %p617 = scmp.ne.s32.totalorder 0, 0
    // Predicated region
    $region46: #{tpu_custom_call.1} parent=1 // pred_check
      %p618 = pneg %p617
    $region47: #{tpu_custom_call.1} parent=1 // pred_check_branch
      %620 = sbr.rel (%p618) target = $region49
    $region48: #{tpu_custom_call.1} parent=1 // pred_region
      %v621 = vld [vmem:[#allocation2] sm:$0xff]
      %v622 = vadd.f32 %v621, %v607
      %623 = vst [vmem:[#allocation2] sm:$0xff] %v622
    $region49: #{tpu_custom_call.1} parent=1 // pred_fallthru
      _
    // Predicated region
    $region50: #{tpu_custom_call.1} parent=1 // pred_check
      %p624 = pneg %p612
    $region51: #{tpu_custom_call.1} parent=1 // pred_check_branch
      %626 = sbr.rel (%p624) target = $region53
    $region52: #{tpu_custom_call.1} parent=1 // pred_region
      %v627 = vld [vmem:[#allocation2] sm:$0xff]
      %v628 = vld [vmem:[#allocation8] sm:$0x1]
      %v630 = vlaneseq
      %v631 = vshrl.u32 %v630, 7
      %v632 = vsub.s32 0, %v631
      %v633 = vrot.slane %v628, %v632
      %v635 = vadd.f32 %v627, %v633
      %v636 = vmax.f32 %v635, 0.0
      %v637 = vpack.c.bf16 %v636, %v636
      %v638 = vld [vmem:[#allocation9] sm:$0xf]
      %v639 = vld [vmem:[#allocation9 + $0x4] sm:$0xf]
      %v640 = vld [vmem:[#allocation9 + $0x8] sm:$0xf]
      %v641 = vld [vmem:[#allocation9 + $0xc] sm:$0xf]
      %v642 = vld [vmem:[#allocation9 + $0x10] sm:$0xf]
      %v643 = vld [vmem:[#allocation9 + $0x14] sm:$0xf]
      %v644 = vld [vmem:[#allocation9 + $0x18] sm:$0xf]
      %v645 = vld [vmem:[#allocation9 + $0x1c] sm:$0xf]
      %v646 = vld [vmem:[#allocation9 + $0x20] sm:$0xf]
      %v647 = vld [vmem:[#allocation9 + $0x24] sm:$0xf]
      %v648 = vld [vmem:[#allocation9 + $0x28] sm:$0xf]
      %v649 = vld [vmem:[#allocation9 + $0x2c] sm:$0xf]
      %v650 = vld [vmem:[#allocation9 + $0x30] sm:$0xf]
      %v651 = vld [vmem:[#allocation9 + $0x34] sm:$0xf]
      %v652 = vld [vmem:[#allocation9 + $0x38] sm:$0xf]
      %v653 = vld [vmem:[#allocation9 + $0x3c] sm:$0xf]
      %v670 = vunpack.c.l.b16 %v638
      %v671 = vunpack.c.l.b16 %v639
      %v672 = vunpack.c.l.b16 %v640
      %v673 = vunpack.c.l.b16 %v641
      %v674 = vunpack.c.l.b16 %v642
      %v675 = vunpack.c.l.b16 %v643
      %v676 = vunpack.c.l.b16 %v644
      %v677 = vunpack.c.l.b16 %v645
      %v678 = vunpack.c.l.b16 %v646
      %v679 = vunpack.c.l.b16 %v647
      %v680 = vunpack.c.l.b16 %v648
      %v681 = vunpack.c.l.b16 %v649
      %v682 = vunpack.c.l.b16 %v650
      %v683 = vunpack.c.l.b16 %v651
      %v684 = vunpack.c.l.b16 %v652
      %v685 = vunpack.c.l.b16 %v653
      %v686 = vpack.c.b16 %v671, %v670
      %v687 = vpack.c.b16 %v673, %v672
      %v688 = vpack.c.b16 %v675, %v674
      %v689 = vpack.c.b16 %v677, %v676
      %v690 = vpack.c.b16 %v679, %v678
      %v691 = vpack.c.b16 %v681, %v680
      %v692 = vpack.c.b16 %v683, %v682
      %v693 = vpack.c.b16 %v685, %v684
      %702 = vmatprep.subr.bf16.mxu0 0
      %703 = vmatpush1.bf16.msra.mxu0 %v686
      %704 = vmatprep.subr.bf16.mxu0 0
      %705 = vmatpush1.bf16.msra.mxu0 %v687
      %706 = vmatprep.subr.bf16.mxu0 0
      %707 = vmatpush1.bf16.msra.mxu0 %v688
      %708 = vmatprep.subr.bf16.mxu0 0
      %709 = vmatpush1.bf16.msra.mxu0 %v689
      %710 = vmatprep.subr.bf16.mxu0 0
      %711 = vmatpush1.bf16.msra.mxu0 %v690
      %712 = vmatprep.subr.bf16.mxu0 0
      %713 = vmatpush1.bf16.msra.mxu0 %v691
      %714 = vmatprep.subr.bf16.mxu0 0
      %715 = vmatpush1.bf16.msra.mxu0 %v692
      %716 = vmatprep.subr.bf16.mxu0 0
      %717 = vmatpush1.bf16.msra.mxu0 %v693
      %718 = vmatprep.subr.bf16.mxu0 0
      %719 = vmatpush1.bf16.msra.mxu0 0
      %720 = vmatprep.subr.bf16.mxu0 0
      %721 = vmatpush1.bf16.msra.mxu0 0
      %722 = vmatprep.subr.bf16.mxu0 0
      %723 = vmatpush1.bf16.msra.mxu0 0
      %724 = vmatprep.subr.bf16.mxu0 0
      %725 = vmatpush1.bf16.msra.mxu0 0
      %726 = vmatprep.subr.bf16.mxu0 0
      %727 = vmatpush1.bf16.msra.mxu0 0
      %728 = vmatprep.subr.bf16.mxu0 0
      %729 = vmatpush1.bf16.msra.mxu0 0
      %730 = vmatprep.subr.bf16.mxu0 0
      %731 = vmatpush1.bf16.msra.mxu0 0
      %732 = vmatprep.subr.bf16.mxu0 0
      %733 = vmatpush1.bf16.msra.mxu0 0
      %734 = vmatprep.mubr.bf16.mxu0 0
      %735 = vmatmul.mubr.bf16.gmra.mrb[0].mxu0 %v637
      %v736 = vpop.f32.mrb[0].mxu0
      %v737 = vadd.f32 0.0, %v736
      %v738 = vpop.f32.mrb[0].mxu0
      %v739 = vpop.f32.mrb[0].mxu0
      %v740 = vpop.f32.mrb[0].mxu0
      %741 = vdwg.mxu0
      %v743 = vcombine.high %v737, %v737
      %vm745 = vcmask 1043456
      %v746 = vsel %vm745, %v737, 0.0
      %v747 = vrot.slane %v746, 4
      %v748 = vadd.f32 %v746, %v747
      %v749 = vrot.slane %v748, 2
      %v750 = vadd.f32 %v748, %v749
      %v751 = vrot.slane %v750, 1
      %v752 = vadd.f32 %v750, %v751
      %v753 = vsel %vm745, %v743, 0.0
      %v754 = vrot.slane %v753, 4
      %v755 = vadd.f32 %v753, %v754
      %v756 = vrot.slane %v755, 2
      %v757 = vadd.f32 %v755, %v756
      %v758 = vrot.slane %v757, 1
      %v759 = vadd.f32 %v757, %v758
      %v760 = vmul.f32 %v752, 0.25
      %v761 = vmul.f32 %v759, 0.25
      %v762 = vld [vmem:[#allocation11] sm:$0x1]
      %v764 = vlaneseq
      %v765 = vshrl.u32 %v764, 7
      %v766 = vsub.s32 0, %v765
      %v767 = vrot.slane %v762, %v766
      %v769 = vadd.f32 %v760, %v767
      %v770 = vadd.f32 %v761, %v767
      %v773 = vrot.slane %v770, 7
      %vm774 = vcmask 1041409
      %v775 = vsel %vm774, %v773, %v769
      %777 = vst [vmem:[#allocation12] sm:$0x3] %v775
    $region53: #{tpu_custom_call.1} parent=1 // pred_fallthru
      _
    // Predicated region
    $region54: #{tpu_custom_call.1} parent=1 // pred_check
      _
    $region55: #{tpu_custom_call.1} parent=1 // pred_check_branch
      %779 = sbr.rel (0) target = $region57
    $region56: #{tpu_custom_call.1} parent=1 // pred_region
      %s781 = ssub.s32 32, 32
      %782 = vsyncadd [#allocation5], %s781
      %s784 = sshll.u32 [#allocation12], 4
      %s785 = int_to_ptr.vmem [resolvable:$true] %s784
      %787 = dma.vmem_to_hbm [thread:$0]  %s785, 32, %s5, [#allocation5]
    $region57: #{tpu_custom_call.1} parent=1 // pred_fallthru
      _
    // Predicated region
    $region58: #{tpu_custom_call.1} parent=1 // pred_check
      _
    $region59: #{tpu_custom_call.1} parent=1 // pred_check_branch
      %789 = sbr.rel (0) target = $region61
    $region60: #{tpu_custom_call.1} parent=1 // pred_region
      %790 = dma.done [#allocation5], 32
    $region61: #{tpu_custom_call.1} parent=1 // pred_fallthru
      _
    %791 = vsyncpa [#allocation4], 1
    %792 = vsyncpa [#allocation7], 1
    %793 = vsyncpa [#allocation10], 1
    %794 = vsyncpa [#allocation5], 1

</llo_original>
